<compile_context>
chip_gen: v7x
topology: tpu7x:2x2x1
jax: 0.10.0
libtpu: 0.0.40
codegen_flags: <defaults>
</compile_context>

<pallas_src>
import jax
import jax.numpy as jnp
from jax import lax
from jax.experimental import pallas as pl
from jax.experimental.pallas import tpu as pltpu


def _make_lstm_kernel(num_layers, B_pad, T, I, H, O_pad, unroll_threshold=16):
    """Builds the Pallas kernel body for a static configuration."""

    def kernel(*refs):
        # refs layout:
        #   refs[0]                      -> x_ref    (T*B_pad, I)  bf16, time-major
        #   refs[1 + 3*l + 0]            -> W_ih^T   (in_l, 4H)    bf16
        #   refs[1 + 3*l + 1]            -> W_hh^T   (H, 4H)       bf16
        #   refs[1 + 3*l + 2]            -> bias     (1, 4H)       f32 (= b_ih + b_hh)
        #   refs[1 + 3*L + 0]            -> W_fc^T   (H, O_pad)    bf16, lane-padded
        #   refs[1 + 3*L + 1]            -> b_fc     (1, O_pad)    f32
        #   refs[1 + 3*L + 2]            -> out_ref  (B_pad, O_pad) f32
        #   refs[1 + 3*L + 3]            -> z_ref    (T*B_pad, 4H) f32 VMEM scratch
        #   refs[1 + 3*L + 4]            -> seq_ref  (T*B_pad, H)  bf16 VMEM scratch (L>1)
        x_ref = refs[0]
        layer_refs = refs[1:1 + 3 * num_layers]
        wfc_ref = refs[1 + 3 * num_layers]
        bfc_ref = refs[2 + 3 * num_layers]
        out_ref = refs[3 + 3 * num_layers]
        z_ref = refs[4 + 3 * num_layers]
        seq_ref = refs[5 + 3 * num_layers] if num_layers > 1 else None

        h_last = None
        for l in range(num_layers):
            wih_t = layer_refs[3 * l + 0][...]   # (in_l, 4H) bf16
            whh_t = layer_refs[3 * l + 1][...]   # (H, 4H)    bf16
            bias = layer_refs[3 * l + 2][...]    # (1, 4H)    f32

            # ---- Hoisted input projection: one (T*B_pad, in) x (in, 4H) bf16
            #      MXU matmul with f32 accumulation. ----
            inp = x_ref[...] if l == 0 else seq_ref[...]
            z_ref[...] = (jnp.dot(inp, wih_t, preferred_element_type=jnp.float32)
                          + bias)

            is_top = (l == num_layers - 1)

            def gate_step(z_t, h, c, _whh_t=whh_t):
                # z_t already contains x_t @ W_ih^T + bias (f32).
                zz = z_t + jnp.dot(h.astype(jnp.bfloat16), _whh_t,
                                   preferred_element_type=jnp.float32)
                sig = jax.nn.sigmoid(zz)         # one full-width (B_pad, 4H) EUP call
                tnh = jnp.tanh(zz)               # one full-width (B_pad, 4H) EUP call
                i_g = sig[:, 0 * H:1 * H]
                f_g = sig[:, 1 * H:2 * H]
                o_g = sig[:, 3 * H:4 * H]
                g_g = tnh[:, 2 * H:3 * H]
                c_new = f_g * c + i_g * g_g      # f32 elementwise state math
                h_new = o_g * jnp.tanh(c_new)
                return h_new, c_new

            h = jnp.zeros((B_pad, H), jnp.float32)
            c = jnp.zeros((B_pad, H), jnp.float32)

            if T <= unroll_threshold:
                # Short static T: fully unrolled, static sublane-aligned offsets.
                for t in range(T):
                    z_t = z_ref[t * B_pad:(t + 1) * B_pad, :]
                    h, c = gate_step(z_t, h, c)
                    if not is_top:
                        seq_ref[t * B_pad:(t + 1) * B_pad, :] = h.astype(jnp.bfloat16)
            else:
                # Long T: bounded vreg pressure via fori_loop with modest unroll;
                # B_pad is a multiple of 8 so the hint keeps accesses unmasked.
                def body(t, carry, _is_top=is_top, _gate_step=gate_step):
                    hh, cc = carry
                    r0 = pl.multiple_of(t * B_pad, B_pad)
                    z_t = z_ref[pl.ds(r0, B_pad), :]
                    hh, cc = _gate_step(z_t, hh, cc)
                    if not _is_top:
                        seq_ref[pl.ds(r0, B_pad), :] = hh.astype(jnp.bfloat16)
                    return (hh, cc)

                h, c = lax.fori_loop(0, T, body, (h, c), unroll=4)

            h_last = h

        # Final Linear on the top layer's last hidden state (lane-dense store).
        out_ref[...] = (jnp.dot(h_last.astype(jnp.bfloat16), wfc_ref[...],
                                preferred_element_type=jnp.float32)
                        + bfc_ref[...])

    return kernel


def lstm_module_forward(x, lstm_params, fc_params, unroll_threshold=16):
    """x: (B, T, I) float32, batch_first, like the PyTorch module."""
    B, T, I = x.shape
    num_layers = len(lstm_params)
    H = lstm_params[0][1].shape[1]               # W_hh: (4H, H)
    wfc, bfc = fc_params
    O = wfc.shape[0]
    O_pad = ((O + 127) // 128) * 128             # lane-dense output tile
    B_pad = ((B + 7) // 8) * 8                   # sublane-aligned batch

    # Pad batch (rows are independent; padding sliced off below), then
    # time-major flatten: row t*B_pad + b holds (batch b, time t).
    x_p = jnp.zeros((B_pad, T, I), jnp.float32).at[:B].set(x.astype(jnp.float32))
    x_tm = jnp.transpose(x_p, (1, 0, 2)).reshape(T * B_pad, I).astype(jnp.bfloat16)

    args = [x_tm]
    for (wih, whh, bih, bhh) in lstm_params:
        args.append(jnp.transpose(wih).astype(jnp.bfloat16))          # (in_l, 4H)
        args.append(jnp.transpose(whh).astype(jnp.bfloat16))          # (H, 4H)
        args.append((bih + bhh).reshape(1, 4 * H).astype(jnp.float32))
    wfc_t = jnp.zeros((H, O_pad), jnp.bfloat16).at[:, :O].set(
        jnp.transpose(wfc).astype(jnp.bfloat16))
    bfc_p = jnp.zeros((1, O_pad), jnp.float32).at[:, :O].set(
        bfc.reshape(1, O).astype(jnp.float32))
    args.append(wfc_t)
    args.append(bfc_p)

    kernel = _make_lstm_kernel(num_layers, B_pad, T, I, H, O_pad, unroll_threshold)

    scratch_shapes = [pltpu.VMEM((T * B_pad, 4 * H), jnp.float32)]     # Z buffer (f32)
    if num_layers > 1:
        scratch_shapes.append(pltpu.VMEM((T * B_pad, H), jnp.bfloat16))  # layer out seq

    # Tight VMEM budget: ~1.35x actual residency (no grid -> no double-buffering
    # of these full-array blocks), clamped to [16 MiB, 48 MiB] (< v7x 64 MiB).
    nbytes = sum(int(a.size) * a.dtype.itemsize for a in args)
    nbytes += B_pad * O_pad * 4                                        # output
    nbytes += T * B_pad * 4 * H * 4                                    # z scratch
    if num_layers > 1:
        nbytes += T * B_pad * H * 2                                    # seq scratch
    vmem_limit = int(min(48 * 1024 * 1024,
                         max(16 * 1024 * 1024, int(1.35 * nbytes))))

    vmem_spec = pl.BlockSpec(memory_space=pltpu.MemorySpace.VMEM)
    out_pad = pl.pallas_call(
        kernel,
        out_shape=jax.ShapeDtypeStruct((B_pad, O_pad), jnp.float32),
        in_specs=[vmem_spec] * len(args),
        out_specs=vmem_spec,
        scratch_shapes=scratch_shapes,
        compiler_params=pltpu.CompilerParams(vmem_limit_bytes=vmem_limit),
    )(*args)
    return out_pad[:B, :O]


def lstm_module_reference(x, lstm_params, fc_params):
    """Pure-JAX f32 reference matching torch.nn.LSTM(batch_first=True) + Linear."""
    B, T, _ = x.shape
    h_seq = x
    for (wih, whh, bih, bhh) in lstm_params:
        H = whh.shape[1]

        def step(carry, x_t):
            h, c = carry
            z = x_t @ wih.T + h @ whh.T + bih + bhh
            i_g = jax.nn.sigmoid(z[:, 0 * H:1 * H])
            f_g = jax.nn.sigmoid(z[:, 1 * H:2 * H])
            g_g = jnp.tanh(z[:, 2 * H:3 * H])
            o_g = jax.nn.sigmoid(z[:, 3 * H:4 * H])
            c_new = f_g * c + i_g * g_g
            h_new = o_g * jnp.tanh(c_new)
            return (h_new, c_new), h_new

        h0 = jnp.zeros((B, H), jnp.float32)
        c0 = jnp.zeros((B, H), jnp.float32)
        (_, _), hs = lax.scan(step, (h0, c0), jnp.transpose(h_seq, (1, 0, 2)))
        h_seq = jnp.transpose(hs, (1, 0, 2))
    wfc, bfc = fc_params
    return h_seq[:, -1, :] @ wfc.T + bfc


def init_params(key, input_size, hidden_size, num_layers, output_size):
    """Deterministic init mimicking PyTorch's U(-1/sqrt(H), 1/sqrt(H))."""
    scale = 1.0 / float(hidden_size) ** 0.5
    lstm_params = []
    for l in range(num_layers):
        in_l = input_size if l == 0 else hidden_size
        key, k1, k2, k3, k4 = jax.random.split(key, 5)
        wih = jax.random.uniform(k1, (4 * hidden_size, in_l),
                                 minval=-scale, maxval=scale, dtype=jnp.float32)
        whh = jax.random.uniform(k2, (4 * hidden_size, hidden_size),
                                 minval=-scale, maxval=scale, dtype=jnp.float32)
        bih = jax.random.uniform(k3, (4 * hidden_size,),
                                 minval=-scale, maxval=scale, dtype=jnp.float32)
        bhh = jax.random.uniform(k4, (4 * hidden_size,),
                                 minval=-scale, maxval=scale, dtype=jnp.float32)
        lstm_params.append((wih, whh, bih, bhh))
    key, k1, k2 = jax.random.split(key, 3)
    wfc = jax.random.uniform(k1, (output_size, hidden_size),
                             minval=-scale, maxval=scale, dtype=jnp.float32)
    bfc = jax.random.uniform(k2, (output_size,),
                             minval=-scale, maxval=scale, dtype=jnp.float32)
    return lstm_params, (wfc, bfc)


if __name__ == "__main__":
    # Small shapes consistent with the module's forward: x is (batch, seq, input_size).
    batch, seq_len = 2, 8
    input_size, hidden_size, num_layers, output_size = 16, 32, 2, 8

    key = jax.random.PRNGKey(0)
    key, kx, kp = jax.random.split(key, 3)
    x = jax.random.normal(kx, (batch, seq_len, input_size), dtype=jnp.float32)
    lstm_params, fc_params = init_params(kp, input_size, hidden_size,
                                         num_layers, output_size)

    out = lstm_module_forward(x, lstm_params, fc_params)
    out = jax.block_until_ready(out)

    ref = jax.block_until_ready(lstm_module_reference(x, lstm_params, fc_params))
    assert out.shape == (batch, output_size)
    # bf16 matmul operands with f32 accumulation/state: looser tolerance vs f32 ref.
    assert jnp.allclose(out, ref, atol=5e-2, rtol=5e-2), (out, ref)

    print("KERNEL_OK")
</pallas_src>

<mosaic_0001>
module attributes {stable_mosaic.version = 11 : i64} {
  func.func @kernel(%arg0: memref<64x16xbf16, #tpu.memory_space<vmem>>, %arg1: memref<16x128xbf16, #tpu.memory_space<vmem>>, %arg2: memref<32x128xbf16, #tpu.memory_space<vmem>>, %arg3: memref<1x128xf32, #tpu.memory_space<vmem>>, %arg4: memref<32x128xbf16, #tpu.memory_space<vmem>>, %arg5: memref<32x128xbf16, #tpu.memory_space<vmem>>, %arg6: memref<1x128xf32, #tpu.memory_space<vmem>>, %arg7: memref<32x128xbf16, #tpu.memory_space<vmem>>, %arg8: memref<1x128xf32, #tpu.memory_space<vmem>>, %arg9: memref<8x128xf32, #tpu.memory_space<vmem>>, %arg10: memref<64x128xf32, #tpu.memory_space<vmem>>, %arg11: memref<64x32xbf16, #tpu.memory_space<vmem>>) attributes {dimension_semantics = [], scalar_prefetch = 0 : i64, scratch_operands = 2 : i64, tpu.core_type = #tpu.core_type<tc>} {
    %c0 = arith.constant 0 : index
    %c0_0 = arith.constant 0 : index
    %0 = vector.load %arg1[%c0, %c0_0] : memref<16x128xbf16, #tpu.memory_space<vmem>>, vector<16x128xbf16>
    %c0_1 = arith.constant 0 : index
    %c0_2 = arith.constant 0 : index
    %1 = vector.load %arg2[%c0_1, %c0_2] : memref<32x128xbf16, #tpu.memory_space<vmem>>, vector<32x128xbf16>
    %c0_3 = arith.constant 0 : index
    %c0_4 = arith.constant 0 : index
    %2 = vector.load %arg3[%c0_3, %c0_4] : memref<1x128xf32, #tpu.memory_space<vmem>>, vector<1x128xf32>
    %c0_5 = arith.constant 0 : index
    %c0_6 = arith.constant 0 : index
    %3 = vector.load %arg0[%c0_5, %c0_6] : memref<64x16xbf16, #tpu.memory_space<vmem>>, vector<64x16xbf16>
    %cst = arith.constant dense<0.000000e+00> : vector<64x128xf32>
    %4 = tpu.matmul %3, %0, %cst {dimension_numbers = #tpu.dot_dimension_numbers<[1], [0], [0], [1], [0, 0, 1, 1], [], []>} : vector<64x16xbf16>, vector<16x128xbf16>, vector<64x128xf32> -> vector<64x128xf32>
    %5 = vector.broadcast %2 : vector<1x128xf32> to vector<64x128xf32>
    %6 = arith.addf %4, %5 : vector<64x128xf32>
    %c0_7 = arith.constant 0 : index
    %c0_8 = arith.constant 0 : index
    %7 = vector.load %arg10[%c0_7, %c0_8] : memref<64x128xf32, #tpu.memory_space<vmem>>, vector<64x128xf32>
    tpu.vector_store %arg10[%c0_7, %c0_8], %6 {strides = array<i32>} : memref<64x128xf32, #tpu.memory_space<vmem>>, vector<64x128xf32>,
    %cst_9 = arith.constant 0.000000e+00 : f32
    %8 = vector.broadcast %cst_9 : f32 to vector<8x32xf32>
    %cst_10 = arith.constant 0.000000e+00 : f32
    %9 = vector.broadcast %cst_10 : f32 to vector<8x32xf32>
    %c0_11 = arith.constant 0 : index
    %c0_12 = arith.constant 0 : index
    %10 = vector.load %arg10[%c0_11, %c0_12] : memref<64x128xf32, #tpu.memory_space<vmem>>, vector<8x128xf32>
    %11 = arith.truncf %8 : vector<8x32xf32> to vector<8x32xbf16>
    %cst_13 = arith.constant dense<0.000000e+00> : vector<8x128xf32>
    %12 = tpu.matmul %11, %1, %cst_13 {dimension_numbers = #tpu.dot_dimension_numbers<[1], [0], [0], [1], [0, 0, 1, 1], [], []>} : vector<8x32xbf16>, vector<32x128xbf16>, vector<8x128xf32> -> vector<8x128xf32>
    %13 = arith.addf %10, %12 : vector<8x128xf32>
    %14 = arith.negf %13 : vector<8x128xf32>
    %15 = math.exp %14 : vector<8x128xf32>
    %cst_14 = arith.constant 1.000000e+00 : f32
    %16 = vector.broadcast %cst_14 : f32 to vector<8x128xf32>
    %17 = arith.addf %16, %15 : vector<8x128xf32>
    %18 = arith.divf %16, %17 : vector<8x128xf32>
    %19 = math.tanh %13 : vector<8x128xf32>
    %20 = vector.extract_strided_slice %18 {offsets = [0, 0], sizes = [8, 32], strides = [1, 1]} : vector<8x128xf32> to vector<8x32xf32>
    %21 = vector.extract_strided_slice %18 {offsets = [0, 32], sizes = [8, 32], strides = [1, 1]} : vector<8x128xf32> to vector<8x32xf32>
    %22 = vector.extract_strided_slice %18 {offsets = [0, 96], sizes = [8, 32], strides = [1, 1]} : vector<8x128xf32> to vector<8x32xf32>
    %23 = vector.extract_strided_slice %19 {offsets = [0, 64], sizes = [8, 32], strides = [1, 1]} : vector<8x128xf32> to vector<8x32xf32>
    %24 = arith.mulf %21, %9 : vector<8x32xf32>
    %25 = arith.mulf %20, %23 : vector<8x32xf32>
    %26 = arith.addf %24, %25 : vector<8x32xf32>
    %27 = math.tanh %26 : vector<8x32xf32>
    %28 = arith.mulf %22, %27 : vector<8x32xf32>
    %29 = arith.truncf %28 : vector<8x32xf32> to vector<8x32xbf16>
    %c0_15 = arith.constant 0 : index
    %c0_16 = arith.constant 0 : index
    %30 = vector.load %arg11[%c0_15, %c0_16] : memref<64x32xbf16, #tpu.memory_space<vmem>>, vector<8x32xbf16>
    tpu.vector_store %arg11[%c0_15, %c0_16], %29 {strides = array<i32>} : memref<64x32xbf16, #tpu.memory_space<vmem>>, vector<8x32xbf16>,
    %c8 = arith.constant 8 : index
    %c0_17 = arith.constant 0 : index
    %31 = vector.load %arg10[%c8, %c0_17] : memref<64x128xf32, #tpu.memory_space<vmem>>, vector<8x128xf32>
    %32 = arith.truncf %28 : vector<8x32xf32> to vector<8x32xbf16>
    %cst_18 = arith.constant dense<0.000000e+00> : vector<8x128xf32>
    %33 = tpu.matmul %32, %1, %cst_18 {dimension_numbers = #tpu.dot_dimension_numbers<[1], [0], [0], [1], [0, 0, 1, 1], [], []>} : vector<8x32xbf16>, vector<32x128xbf16>, vector<8x128xf32> -> vector<8x128xf32>
    %34 = arith.addf %31, %33 : vector<8x128xf32>
    %35 = arith.negf %34 : vector<8x128xf32>
    %36 = math.exp %35 : vector<8x128xf32>
    %cst_19 = arith.constant 1.000000e+00 : f32
    %37 = vector.broadcast %cst_19 : f32 to vector<8x128xf32>
    %38 = arith.addf %37, %36 : vector<8x128xf32>
    %39 = arith.divf %37, %38 : vector<8x128xf32>
    %40 = math.tanh %34 : vector<8x128xf32>
    %41 = vector.extract_strided_slice %39 {offsets = [0, 0], sizes = [8, 32], strides = [1, 1]} : vector<8x128xf32> to vector<8x32xf32>
    %42 = vector.extract_strided_slice %39 {offsets = [0, 32], sizes = [8, 32], strides = [1, 1]} : vector<8x128xf32> to vector<8x32xf32>
    %43 = vector.extract_strided_slice %39 {offsets = [0, 96], sizes = [8, 32], strides = [1, 1]} : vector<8x128xf32> to vector<8x32xf32>
    %44 = vector.extract_strided_slice %40 {offsets = [0, 64], sizes = [8, 32], strides = [1, 1]} : vector<8x128xf32> to vector<8x32xf32>
    %45 = arith.mulf %42, %26 : vector<8x32xf32>
    %46 = arith.mulf %41, %44 : vector<8x32xf32>
    %47 = arith.addf %45, %46 : vector<8x32xf32>
    %48 = math.tanh %47 : vector<8x32xf32>
    %49 = arith.mulf %43, %48 : vector<8x32xf32>
    %50 = arith.truncf %49 : vector<8x32xf32> to vector<8x32xbf16>
    %c8_20 = arith.constant 8 : index
    %c0_21 = arith.constant 0 : index
    %51 = vector.load %arg11[%c8_20, %c0_21] : memref<64x32xbf16, #tpu.memory_space<vmem>>, vector<8x32xbf16>
    tpu.vector_store %arg11[%c8_20, %c0_21], %50 {strides = array<i32>} : memref<64x32xbf16, #tpu.memory_space<vmem>>, vector<8x32xbf16>,
    %c16 = arith.constant 16 : index
    %c0_22 = arith.constant 0 : index
    %52 = vector.load %arg10[%c16, %c0_22] : memref<64x128xf32, #tpu.memory_space<vmem>>, vector<8x128xf32>
    %53 = arith.truncf %49 : vector<8x32xf32> to vector<8x32xbf16>
    %cst_23 = arith.constant dense<0.000000e+00> : vector<8x128xf32>
    %54 = tpu.matmul %53, %1, %cst_23 {dimension_numbers = #tpu.dot_dimension_numbers<[1], [0], [0], [1], [0, 0, 1, 1], [], []>} : vector<8x32xbf16>, vector<32x128xbf16>, vector<8x128xf32> -> vector<8x128xf32>
    %55 = arith.addf %52, %54 : vector<8x128xf32>
    %56 = arith.negf %55 : vector<8x128xf32>
    %57 = math.exp %56 : vector<8x128xf32>
    %cst_24 = arith.constant 1.000000e+00 : f32
    %58 = vector.broadcast %cst_24 : f32 to vector<8x128xf32>
    %59 = arith.addf %58, %57 : vector<8x128xf32>
    %60 = arith.divf %58, %59 : vector<8x128xf32>
    %61 = math.tanh %55 : vector<8x128xf32>
    %62 = vector.extract_strided_slice %60 {offsets = [0, 0], sizes = [8, 32], strides = [1, 1]} : vector<8x128xf32> to vector<8x32xf32>
    %63 = vector.extract_strided_slice %60 {offsets = [0, 32], sizes = [8, 32], strides = [1, 1]} : vector<8x128xf32> to vector<8x32xf32>
    %64 = vector.extract_strided_slice %60 {offsets = [0, 96], sizes = [8, 32], strides = [1, 1]} : vector<8x128xf32> to vector<8x32xf32>
    %65 = vector.extract_strided_slice %61 {offsets = [0, 64], sizes = [8, 32], strides = [1, 1]} : vector<8x128xf32> to vector<8x32xf32>
    %66 = arith.mulf %63, %47 : vector<8x32xf32>
    %67 = arith.mulf %62, %65 : vector<8x32xf32>
    %68 = arith.addf %66, %67 : vector<8x32xf32>
    %69 = math.tanh %68 : vector<8x32xf32>
    %70 = arith.mulf %64, %69 : vector<8x32xf32>
    %71 = arith.truncf %70 : vector<8x32xf32> to vector<8x32xbf16>
    %c16_25 = arith.constant 16 : index
    %c0_26 = arith.constant 0 : index
    %72 = vector.load %arg11[%c16_25, %c0_26] : memref<64x32xbf16, #tpu.memory_space<vmem>>, vector<8x32xbf16>
    tpu.vector_store %arg11[%c16_25, %c0_26], %71 {strides = array<i32>} : memref<64x32xbf16, #tpu.memory_space<vmem>>, vector<8x32xbf16>,
    %c24 = arith.constant 24 : index
    %c0_27 = arith.constant 0 : index
    %73 = vector.load %arg10[%c24, %c0_27] : memref<64x128xf32, #tpu.memory_space<vmem>>, vector<8x128xf32>
    %74 = arith.truncf %70 : vector<8x32xf32> to vector<8x32xbf16>
    %cst_28 = arith.constant dense<0.000000e+00> : vector<8x128xf32>
    %75 = tpu.matmul %74, %1, %cst_28 {dimension_numbers = #tpu.dot_dimension_numbers<[1], [0], [0], [1], [0, 0, 1, 1], [], []>} : vector<8x32xbf16>, vector<32x128xbf16>, vector<8x128xf32> -> vector<8x128xf32>
    %76 = arith.addf %73, %75 : vector<8x128xf32>
    %77 = arith.negf %76 : vector<8x128xf32>
    %78 = math.exp %77 : vector<8x128xf32>
    %cst_29 = arith.constant 1.000000e+00 : f32
    %79 = vector.broadcast %cst_29 : f32 to vector<8x128xf32>
    %80 = arith.addf %79, %78 : vector<8x128xf32>
    %81 = arith.divf %79, %80 : vector<8x128xf32>
    %82 = math.tanh %76 : vector<8x128xf32>
    %83 = vector.extract_strided_slice %81 {offsets = [0, 0], sizes = [8, 32], strides = [1, 1]} : vector<8x128xf32> to vector<8x32xf32>
    %84 = vector.extract_strided_slice %81 {offsets = [0, 32], sizes = [8, 32], strides = [1, 1]} : vector<8x128xf32> to vector<8x32xf32>
    %85 = vector.extract_strided_slice %81 {offsets = [0, 96], sizes = [8, 32], strides = [1, 1]} : vector<8x128xf32> to vector<8x32xf32>
    %86 = vector.extract_strided_slice %82 {offsets = [0, 64], sizes = [8, 32], strides = [1, 1]} : vector<8x128xf32> to vector<8x32xf32>
    %87 = arith.mulf %84, %68 : vector<8x32xf32>
    %88 = arith.mulf %83, %86 : vector<8x32xf32>
    %89 = arith.addf %87, %88 : vector<8x32xf32>
    %90 = math.tanh %89 : vector<8x32xf32>
    %91 = arith.mulf %85, %90 : vector<8x32xf32>
    %92 = arith.truncf %91 : vector<8x32xf32> to vector<8x32xbf16>
    %c24_30 = arith.constant 24 : index
    %c0_31 = arith.constant 0 : index
    %93 = vector.load %arg11[%c24_30, %c0_31] : memref<64x32xbf16, #tpu.memory_space<vmem>>, vector<8x32xbf16>
    tpu.vector_store %arg11[%c24_30, %c0_31], %92 {strides = array<i32>} : memref<64x32xbf16, #tpu.memory_space<vmem>>, vector<8x32xbf16>,
    %c32 = arith.constant 32 : index
    %c0_32 = arith.constant 0 : index
    %94 = vector.load %arg10[%c32, %c0_32] : memref<64x128xf32, #tpu.memory_space<vmem>>, vector<8x128xf32>
    %95 = arith.truncf %91 : vector<8x32xf32> to vector<8x32xbf16>
    %cst_33 = arith.constant dense<0.000000e+00> : vector<8x128xf32>
    %96 = tpu.matmul %95, %1, %cst_33 {dimension_numbers = #tpu.dot_dimension_numbers<[1], [0], [0], [1], [0, 0, 1, 1], [], []>} : vector<8x32xbf16>, vector<32x128xbf16>, vector<8x128xf32> -> vector<8x128xf32>
    %97 = arith.addf %94, %96 : vector<8x128xf32>
    %98 = arith.negf %97 : vector<8x128xf32>
    %99 = math.exp %98 : vector<8x128xf32>
    %cst_34 = arith.constant 1.000000e+00 : f32
    %100 = vector.broadcast %cst_34 : f32 to vector<8x128xf32>
    %101 = arith.addf %100, %99 : vector<8x128xf32>
    %102 = arith.divf %100, %101 : vector<8x128xf32>
    %103 = math.tanh %97 : vector<8x128xf32>
    %104 = vector.extract_strided_slice %102 {offsets = [0, 0], sizes = [8, 32], strides = [1, 1]} : vector<8x128xf32> to vector<8x32xf32>
    %105 = vector.extract_strided_slice %102 {offsets = [0, 32], sizes = [8, 32], strides = [1, 1]} : vector<8x128xf32> to vector<8x32xf32>
    %106 = vector.extract_strided_slice %102 {offsets = [0, 96], sizes = [8, 32], strides = [1, 1]} : vector<8x128xf32> to vector<8x32xf32>
    %107 = vector.extract_strided_slice %103 {offsets = [0, 64], sizes = [8, 32], strides = [1, 1]} : vector<8x128xf32> to vector<8x32xf32>
    %108 = arith.mulf %105, %89 : vector<8x32xf32>
    %109 = arith.mulf %104, %107 : vector<8x32xf32>
    %110 = arith.addf %108, %109 : vector<8x32xf32>
    %111 = math.tanh %110 : vector<8x32xf32>
    %112 = arith.mulf %106, %111 : vector<8x32xf32>
    %113 = arith.truncf %112 : vector<8x32xf32> to vector<8x32xbf16>
    %c32_35 = arith.constant 32 : index
    %c0_36 = arith.constant 0 : index
    %114 = vector.load %arg11[%c32_35, %c0_36] : memref<64x32xbf16, #tpu.memory_space<vmem>>, vector<8x32xbf16>
    tpu.vector_store %arg11[%c32_35, %c0_36], %113 {strides = array<i32>} : memref<64x32xbf16, #tpu.memory_space<vmem>>, vector<8x32xbf16>,
    %c40 = arith.constant 40 : index
    %c0_37 = arith.constant 0 : index
    %115 = vector.load %arg10[%c40, %c0_37] : memref<64x128xf32, #tpu.memory_space<vmem>>, vector<8x128xf32>
    %116 = arith.truncf %112 : vector<8x32xf32> to vector<8x32xbf16>
    %cst_38 = arith.constant dense<0.000000e+00> : vector<8x128xf32>
    %117 = tpu.matmul %116, %1, %cst_38 {dimension_numbers = #tpu.dot_dimension_numbers<[1], [0], [0], [1], [0, 0, 1, 1], [], []>} : vector<8x32xbf16>, vector<32x128xbf16>, vector<8x128xf32> -> vector<8x128xf32>
    %118 = arith.addf %115, %117 : vector<8x128xf32>
    %119 = arith.negf %118 : vector<8x128xf32>
    %120 = math.exp %119 : vector<8x128xf32>
    %cst_39 = arith.constant 1.000000e+00 : f32
    %121 = vector.broadcast %cst_39 : f32 to vector<8x128xf32>
    %122 = arith.addf %121, %120 : vector<8x128xf32>
    %123 = arith.divf %121, %122 : vector<8x128xf32>
    %124 = math.tanh %118 : vector<8x128xf32>
    %125 = vector.extract_strided_slice %123 {offsets = [0, 0], sizes = [8, 32], strides = [1, 1]} : vector<8x128xf32> to vector<8x32xf32>
    %126 = vector.extract_strided_slice %123 {offsets = [0, 32], sizes = [8, 32], strides = [1, 1]} : vector<8x128xf32> to vector<8x32xf32>
    %127 = vector.extract_strided_slice %123 {offsets = [0, 96], sizes = [8, 32], strides = [1, 1]} : vector<8x128xf32> to vector<8x32xf32>
    %128 = vector.extract_strided_slice %124 {offsets = [0, 64], sizes = [8, 32], strides = [1, 1]} : vector<8x128xf32> to vector<8x32xf32>
    %129 = arith.mulf %126, %110 : vector<8x32xf32>
    %130 = arith.mulf %125, %128 : vector<8x32xf32>
    %131 = arith.addf %129, %130 : vector<8x32xf32>
    %132 = math.tanh %131 : vector<8x32xf32>
    %133 = arith.mulf %127, %132 : vector<8x32xf32>
    %134 = arith.truncf %133 : vector<8x32xf32> to vector<8x32xbf16>
    %c40_40 = arith.constant 40 : index
    %c0_41 = arith.constant 0 : index
    %135 = vector.load %arg11[%c40_40, %c0_41] : memref<64x32xbf16, #tpu.memory_space<vmem>>, vector<8x32xbf16>
    tpu.vector_store %arg11[%c40_40, %c0_41], %134 {strides = array<i32>} : memref<64x32xbf16, #tpu.memory_space<vmem>>, vector<8x32xbf16>,
    %c48 = arith.constant 48 : index
    %c0_42 = arith.constant 0 : index
    %136 = vector.load %arg10[%c48, %c0_42] : memref<64x128xf32, #tpu.memory_space<vmem>>, vector<8x128xf32>
    %137 = arith.truncf %133 : vector<8x32xf32> to vector<8x32xbf16>
    %cst_43 = arith.constant dense<0.000000e+00> : vector<8x128xf32>
    %138 = tpu.matmul %137, %1, %cst_43 {dimension_numbers = #tpu.dot_dimension_numbers<[1], [0], [0], [1], [0, 0, 1, 1], [], []>} : vector<8x32xbf16>, vector<32x128xbf16>, vector<8x128xf32> -> vector<8x128xf32>
    %139 = arith.addf %136, %138 : vector<8x128xf32>
    %140 = arith.negf %139 : vector<8x128xf32>
    %141 = math.exp %140 : vector<8x128xf32>
    %cst_44 = arith.constant 1.000000e+00 : f32
    %142 = vector.broadcast %cst_44 : f32 to vector<8x128xf32>
    %143 = arith.addf %142, %141 : vector<8x128xf32>
    %144 = arith.divf %142, %143 : vector<8x128xf32>
    %145 = math.tanh %139 : vector<8x128xf32>
    %146 = vector.extract_strided_slice %144 {offsets = [0, 0], sizes = [8, 32], strides = [1, 1]} : vector<8x128xf32> to vector<8x32xf32>
    %147 = vector.extract_strided_slice %144 {offsets = [0, 32], sizes = [8, 32], strides = [1, 1]} : vector<8x128xf32> to vector<8x32xf32>
    %148 = vector.extract_strided_slice %144 {offsets = [0, 96], sizes = [8, 32], strides = [1, 1]} : vector<8x128xf32> to vector<8x32xf32>
    %149 = vector.extract_strided_slice %145 {offsets = [0, 64], sizes = [8, 32], strides = [1, 1]} : vector<8x128xf32> to vector<8x32xf32>
    %150 = arith.mulf %147, %131 : vector<8x32xf32>
    %151 = arith.mulf %146, %149 : vector<8x32xf32>
    %152 = arith.addf %150, %151 : vector<8x32xf32>
    %153 = math.tanh %152 : vector<8x32xf32>
    %154 = arith.mulf %148, %153 : vector<8x32xf32>
    %155 = arith.truncf %154 : vector<8x32xf32> to vector<8x32xbf16>
    %c48_45 = arith.constant 48 : index
    %c0_46 = arith.constant 0 : index
    %156 = vector.load %arg11[%c48_45, %c0_46] : memref<64x32xbf16, #tpu.memory_space<vmem>>, vector<8x32xbf16>
    tpu.vector_store %arg11[%c48_45, %c0_46], %155 {strides = array<i32>} : memref<64x32xbf16, #tpu.memory_space<vmem>>, vector<8x32xbf16>,
    %c56 = arith.constant 56 : index
    %c0_47 = arith.constant 0 : index
    %157 = vector.load %arg10[%c56, %c0_47] : memref<64x128xf32, #tpu.memory_space<vmem>>, vector<8x128xf32>
    %158 = arith.truncf %154 : vector<8x32xf32> to vector<8x32xbf16>
    %cst_48 = arith.constant dense<0.000000e+00> : vector<8x128xf32>
    %159 = tpu.matmul %158, %1, %cst_48 {dimension_numbers = #tpu.dot_dimension_numbers<[1], [0], [0], [1], [0, 0, 1, 1], [], []>} : vector<8x32xbf16>, vector<32x128xbf16>, vector<8x128xf32> -> vector<8x128xf32>
    %160 = arith.addf %157, %159 : vector<8x128xf32>
    %161 = arith.negf %160 : vector<8x128xf32>
    %162 = math.exp %161 : vector<8x128xf32>
    %cst_49 = arith.constant 1.000000e+00 : f32
    %163 = vector.broadcast %cst_49 : f32 to vector<8x128xf32>
    %164 = arith.addf %163, %162 : vector<8x128xf32>
    %165 = arith.divf %163, %164 : vector<8x128xf32>
    %166 = math.tanh %160 : vector<8x128xf32>
    %167 = vector.extract_strided_slice %165 {offsets = [0, 0], sizes = [8, 32], strides = [1, 1]} : vector<8x128xf32> to vector<8x32xf32>
    %168 = vector.extract_strided_slice %165 {offsets = [0, 32], sizes = [8, 32], strides = [1, 1]} : vector<8x128xf32> to vector<8x32xf32>
    %169 = vector.extract_strided_slice %165 {offsets = [0, 96], sizes = [8, 32], strides = [1, 1]} : vector<8x128xf32> to vector<8x32xf32>
    %170 = vector.extract_strided_slice %166 {offsets = [0, 64], sizes = [8, 32], strides = [1, 1]} : vector<8x128xf32> to vector<8x32xf32>
    %171 = arith.mulf %168, %152 : vector<8x32xf32>
    %172 = arith.mulf %167, %170 : vector<8x32xf32>
    %173 = arith.addf %171, %172 : vector<8x32xf32>
    %174 = math.tanh %173 : vector<8x32xf32>
    %175 = arith.mulf %169, %174 : vector<8x32xf32>
    %176 = arith.truncf %175 : vector<8x32xf32> to vector<8x32xbf16>
    %c56_50 = arith.constant 56 : index
    %c0_51 = arith.constant 0 : index
    %177 = vector.load %arg11[%c56_50, %c0_51] : memref<64x32xbf16, #tpu.memory_space<vmem>>, vector<8x32xbf16>
    tpu.vector_store %arg11[%c56_50, %c0_51], %176 {strides = array<i32>} : memref<64x32xbf16, #tpu.memory_space<vmem>>, vector<8x32xbf16>,
    %c0_52 = arith.constant 0 : index
    %c0_53 = arith.constant 0 : index
    %178 = vector.load %arg4[%c0_52, %c0_53] : memref<32x128xbf16, #tpu.memory_space<vmem>>, vector<32x128xbf16>
    %c0_54 = arith.constant 0 : index
    %c0_55 = arith.constant 0 : index
    %179 = vector.load %arg5[%c0_54, %c0_55] : memref<32x128xbf16, #tpu.memory_space<vmem>>, vector<32x128xbf16>
    %c0_56 = arith.constant 0 : index
    %c0_57 = arith.constant 0 : index
    %180 = vector.load %arg6[%c0_56, %c0_57] : memref<1x128xf32, #tpu.memory_space<vmem>>, vector<1x128xf32>
    %c0_58 = arith.constant 0 : index
    %c0_59 = arith.constant 0 : index
    %181 = vector.load %arg11[%c0_58, %c0_59] : memref<64x32xbf16, #tpu.memory_space<vmem>>, vector<64x32xbf16>
    %cst_60 = arith.constant dense<0.000000e+00> : vector<64x128xf32>
    %182 = tpu.matmul %181, %178, %cst_60 {dimension_numbers = #tpu.dot_dimension_numbers<[1], [0], [0], [1], [0, 0, 1, 1], [], []>} : vector<64x32xbf16>, vector<32x128xbf16>, vector<64x128xf32> -> vector<64x128xf32>
    %183 = vector.broadcast %180 : vector<1x128xf32> to vector<64x128xf32>
    %184 = arith.addf %182, %183 : vector<64x128xf32>
    %c0_61 = arith.constant 0 : index
    %c0_62 = arith.constant 0 : index
    %185 = vector.load %arg10[%c0_61, %c0_62] : memref<64x128xf32, #tpu.memory_space<vmem>>, vector<64x128xf32>
    tpu.vector_store %arg10[%c0_61, %c0_62], %184 {strides = array<i32>} : memref<64x128xf32, #tpu.memory_space<vmem>>, vector<64x128xf32>,
    %cst_63 = arith.constant 0.000000e+00 : f32
    %186 = vector.broadcast %cst_63 : f32 to vector<8x32xf32>
    %cst_64 = arith.constant 0.000000e+00 : f32
    %187 = vector.broadcast %cst_64 : f32 to vector<8x32xf32>
    %c0_65 = arith.constant 0 : index
    %c0_66 = arith.constant 0 : index
    %188 = vector.load %arg10[%c0_65, %c0_66] : memref<64x128xf32, #tpu.memory_space<vmem>>, vector<8x128xf32>
    %189 = arith.truncf %186 : vector<8x32xf32> to vector<8x32xbf16>
    %cst_67 = arith.constant dense<0.000000e+00> : vector<8x128xf32>
    %190 = tpu.matmul %189, %179, %cst_67 {dimension_numbers = #tpu.dot_dimension_numbers<[1], [0], [0], [1], [0, 0, 1, 1], [], []>} : vector<8x32xbf16>, vector<32x128xbf16>, vector<8x128xf32> -> vector<8x128xf32>
    %191 = arith.addf %188, %190 : vector<8x128xf32>
    %192 = arith.negf %191 : vector<8x128xf32>
    %193 = math.exp %192 : vector<8x128xf32>
    %cst_68 = arith.constant 1.000000e+00 : f32
    %194 = vector.broadcast %cst_68 : f32 to vector<8x128xf32>
    %195 = arith.addf %194, %193 : vector<8x128xf32>
    %196 = arith.divf %194, %195 : vector<8x128xf32>
    %197 = math.tanh %191 : vector<8x128xf32>
    %198 = vector.extract_strided_slice %196 {offsets = [0, 0], sizes = [8, 32], strides = [1, 1]} : vector<8x128xf32> to vector<8x32xf32>
    %199 = vector.extract_strided_slice %196 {offsets = [0, 32], sizes = [8, 32], strides = [1, 1]} : vector<8x128xf32> to vector<8x32xf32>
    %200 = vector.extract_strided_slice %196 {offsets = [0, 96], sizes = [8, 32], strides = [1, 1]} : vector<8x128xf32> to vector<8x32xf32>
    %201 = vector.extract_strided_slice %197 {offsets = [0, 64], sizes = [8, 32], strides = [1, 1]} : vector<8x128xf32> to vector<8x32xf32>
    %202 = arith.mulf %199, %187 : vector<8x32xf32>
    %203 = arith.mulf %198, %201 : vector<8x32xf32>
    %204 = arith.addf %202, %203 : vector<8x32xf32>
    %205 = math.tanh %204 : vector<8x32xf32>
    %206 = arith.mulf %200, %205 : vector<8x32xf32>
    %c8_69 = arith.constant 8 : index
    %c0_70 = arith.constant 0 : index
    %207 = vector.load %arg10[%c8_69, %c0_70] : memref<64x128xf32, #tpu.memory_space<vmem>>, vector<8x128xf32>
    %208 = arith.truncf %206 : vector<8x32xf32> to vector<8x32xbf16>
    %cst_71 = arith.constant dense<0.000000e+00> : vector<8x128xf32>
    %209 = tpu.matmul %208, %179, %cst_71 {dimension_numbers = #tpu.dot_dimension_numbers<[1], [0], [0], [1], [0, 0, 1, 1], [], []>} : vector<8x32xbf16>, vector<32x128xbf16>, vector<8x128xf32> -> vector<8x128xf32>
    %210 = arith.addf %207, %209 : vector<8x128xf32>
    %211 = arith.negf %210 : vector<8x128xf32>
    %212 = math.exp %211 : vector<8x128xf32>
    %cst_72 = arith.constant 1.000000e+00 : f32
    %213 = vector.broadcast %cst_72 : f32 to vector<8x128xf32>
    %214 = arith.addf %213, %212 : vector<8x128xf32>
    %215 = arith.divf %213, %214 : vector<8x128xf32>
    %216 = math.tanh %210 : vector<8x128xf32>
    %217 = vector.extract_strided_slice %215 {offsets = [0, 0], sizes = [8, 32], strides = [1, 1]} : vector<8x128xf32> to vector<8x32xf32>
    %218 = vector.extract_strided_slice %215 {offsets = [0, 32], sizes = [8, 32], strides = [1, 1]} : vector<8x128xf32> to vector<8x32xf32>
    %219 = vector.extract_strided_slice %215 {offsets = [0, 96], sizes = [8, 32], strides = [1, 1]} : vector<8x128xf32> to vector<8x32xf32>
    %220 = vector.extract_strided_slice %216 {offsets = [0, 64], sizes = [8, 32], strides = [1, 1]} : vector<8x128xf32> to vector<8x32xf32>
    %221 = arith.mulf %218, %204 : vector<8x32xf32>
    %222 = arith.mulf %217, %220 : vector<8x32xf32>
    %223 = arith.addf %221, %222 : vector<8x32xf32>
    %224 = math.tanh %223 : vector<8x32xf32>
    %225 = arith.mulf %219, %224 : vector<8x32xf32>
    %c16_73 = arith.constant 16 : index
    %c0_74 = arith.constant 0 : index
    %226 = vector.load %arg10[%c16_73, %c0_74] : memref<64x128xf32, #tpu.memory_space<vmem>>, vector<8x128xf32>
    %227 = arith.truncf %225 : vector<8x32xf32> to vector<8x32xbf16>
    %cst_75 = arith.constant dense<0.000000e+00> : vector<8x128xf32>
    %228 = tpu.matmul %227, %179, %cst_75 {dimension_numbers = #tpu.dot_dimension_numbers<[1], [0], [0], [1], [0, 0, 1, 1], [], []>} : vector<8x32xbf16>, vector<32x128xbf16>, vector<8x128xf32> -> vector<8x128xf32>
    %229 = arith.addf %226, %228 : vector<8x128xf32>
    %230 = arith.negf %229 : vector<8x128xf32>
    %231 = math.exp %230 : vector<8x128xf32>
    %cst_76 = arith.constant 1.000000e+00 : f32
    %232 = vector.broadcast %cst_76 : f32 to vector<8x128xf32>
    %233 = arith.addf %232, %231 : vector<8x128xf32>
    %234 = arith.divf %232, %233 : vector<8x128xf32>
    %235 = math.tanh %229 : vector<8x128xf32>
    %236 = vector.extract_strided_slice %234 {offsets = [0, 0], sizes = [8, 32], strides = [1, 1]} : vector<8x128xf32> to vector<8x32xf32>
    %237 = vector.extract_strided_slice %234 {offsets = [0, 32], sizes = [8, 32], strides = [1, 1]} : vector<8x128xf32> to vector<8x32xf32>
    %238 = vector.extract_strided_slice %234 {offsets = [0, 96], sizes = [8, 32], strides = [1, 1]} : vector<8x128xf32> to vector<8x32xf32>
    %239 = vector.extract_strided_slice %235 {offsets = [0, 64], sizes = [8, 32], strides = [1, 1]} : vector<8x128xf32> to vector<8x32xf32>
    %240 = arith.mulf %237, %223 : vector<8x32xf32>
    %241 = arith.mulf %236, %239 : vector<8x32xf32>
    %242 = arith.addf %240, %241 : vector<8x32xf32>
    %243 = math.tanh %242 : vector<8x32xf32>
    %244 = arith.mulf %238, %243 : vector<8x32xf32>
    %c24_77 = arith.constant 24 : index
    %c0_78 = arith.constant 0 : index
    %245 = vector.load %arg10[%c24_77, %c0_78] : memref<64x128xf32, #tpu.memory_space<vmem>>, vector<8x128xf32>
    %246 = arith.truncf %244 : vector<8x32xf32> to vector<8x32xbf16>
    %cst_79 = arith.constant dense<0.000000e+00> : vector<8x128xf32>
    %247 = tpu.matmul %246, %179, %cst_79 {dimension_numbers = #tpu.dot_dimension_numbers<[1], [0], [0], [1], [0, 0, 1, 1], [], []>} : vector<8x32xbf16>, vector<32x128xbf16>, vector<8x128xf32> -> vector<8x128xf32>
    %248 = arith.addf %245, %247 : vector<8x128xf32>
    %249 = arith.negf %248 : vector<8x128xf32>
    %250 = math.exp %249 : vector<8x128xf32>
    %cst_80 = arith.constant 1.000000e+00 : f32
    %251 = vector.broadcast %cst_80 : f32 to vector<8x128xf32>
    %252 = arith.addf %251, %250 : vector<8x128xf32>
    %253 = arith.divf %251, %252 : vector<8x128xf32>
    %254 = math.tanh %248 : vector<8x128xf32>
    %255 = vector.extract_strided_slice %253 {offsets = [0, 0], sizes = [8, 32], strides = [1, 1]} : vector<8x128xf32> to vector<8x32xf32>
    %256 = vector.extract_strided_slice %253 {offsets = [0, 32], sizes = [8, 32], strides = [1, 1]} : vector<8x128xf32> to vector<8x32xf32>
    %257 = vector.extract_strided_slice %253 {offsets = [0, 96], sizes = [8, 32], strides = [1, 1]} : vector<8x128xf32> to vector<8x32xf32>
    %258 = vector.extract_strided_slice %254 {offsets = [0, 64], sizes = [8, 32], strides = [1, 1]} : vector<8x128xf32> to vector<8x32xf32>
    %259 = arith.mulf %256, %242 : vector<8x32xf32>
    %260 = arith.mulf %255, %258 : vector<8x32xf32>
    %261 = arith.addf %259, %260 : vector<8x32xf32>
    %262 = math.tanh %261 : vector<8x32xf32>
    %263 = arith.mulf %257, %262 : vector<8x32xf32>
    %c32_81 = arith.constant 32 : index
    %c0_82 = arith.constant 0 : index
    %264 = vector.load %arg10[%c32_81, %c0_82] : memref<64x128xf32, #tpu.memory_space<vmem>>, vector<8x128xf32>
    %265 = arith.truncf %263 : vector<8x32xf32> to vector<8x32xbf16>
    %cst_83 = arith.constant dense<0.000000e+00> : vector<8x128xf32>
    %266 = tpu.matmul %265, %179, %cst_83 {dimension_numbers = #tpu.dot_dimension_numbers<[1], [0], [0], [1], [0, 0, 1, 1], [], []>} : vector<8x32xbf16>, vector<32x128xbf16>, vector<8x128xf32> -> vector<8x128xf32>
    %267 = arith.addf %264, %266 : vector<8x128xf32>
    %268 = arith.negf %267 : vector<8x128xf32>
    %269 = math.exp %268 : vector<8x128xf32>
    %cst_84 = arith.constant 1.000000e+00 : f32
    %270 = vector.broadcast %cst_84 : f32 to vector<8x128xf32>
    %271 = arith.addf %270, %269 : vector<8x128xf32>
    %272 = arith.divf %270, %271 : vector<8x128xf32>
    %273 = math.tanh %267 : vector<8x128xf32>
    %274 = vector.extract_strided_slice %272 {offsets = [0, 0], sizes = [8, 32], strides = [1, 1]} : vector<8x128xf32> to vector<8x32xf32>
    %275 = vector.extract_strided_slice %272 {offsets = [0, 32], sizes = [8, 32], strides = [1, 1]} : vector<8x128xf32> to vector<8x32xf32>
    %276 = vector.extract_strided_slice %272 {offsets = [0, 96], sizes = [8, 32], strides = [1, 1]} : vector<8x128xf32> to vector<8x32xf32>
    %277 = vector.extract_strided_slice %273 {offsets = [0, 64], sizes = [8, 32], strides = [1, 1]} : vector<8x128xf32> to vector<8x32xf32>
    %278 = arith.mulf %275, %261 : vector<8x32xf32>
    %279 = arith.mulf %274, %277 : vector<8x32xf32>
    %280 = arith.addf %278, %279 : vector<8x32xf32>
    %281 = math.tanh %280 : vector<8x32xf32>
    %282 = arith.mulf %276, %281 : vector<8x32xf32>
    %c40_85 = arith.constant 40 : index
    %c0_86 = arith.constant 0 : index
    %283 = vector.load %arg10[%c40_85, %c0_86] : memref<64x128xf32, #tpu.memory_space<vmem>>, vector<8x128xf32>
    %284 = arith.truncf %282 : vector<8x32xf32> to vector<8x32xbf16>
    %cst_87 = arith.constant dense<0.000000e+00> : vector<8x128xf32>
    %285 = tpu.matmul %284, %179, %cst_87 {dimension_numbers = #tpu.dot_dimension_numbers<[1], [0], [0], [1], [0, 0, 1, 1], [], []>} : vector<8x32xbf16>, vector<32x128xbf16>, vector<8x128xf32> -> vector<8x128xf32>
    %286 = arith.addf %283, %285 : vector<8x128xf32>
    %287 = arith.negf %286 : vector<8x128xf32>
    %288 = math.exp %287 : vector<8x128xf32>
    %cst_88 = arith.constant 1.000000e+00 : f32
    %289 = vector.broadcast %cst_88 : f32 to vector<8x128xf32>
    %290 = arith.addf %289, %288 : vector<8x128xf32>
    %291 = arith.divf %289, %290 : vector<8x128xf32>
    %292 = math.tanh %286 : vector<8x128xf32>
    %293 = vector.extract_strided_slice %291 {offsets = [0, 0], sizes = [8, 32], strides = [1, 1]} : vector<8x128xf32> to vector<8x32xf32>
    %294 = vector.extract_strided_slice %291 {offsets = [0, 32], sizes = [8, 32], strides = [1, 1]} : vector<8x128xf32> to vector<8x32xf32>
    %295 = vector.extract_strided_slice %291 {offsets = [0, 96], sizes = [8, 32], strides = [1, 1]} : vector<8x128xf32> to vector<8x32xf32>
    %296 = vector.extract_strided_slice %292 {offsets = [0, 64], sizes = [8, 32], strides = [1, 1]} : vector<8x128xf32> to vector<8x32xf32>
    %297 = arith.mulf %294, %280 : vector<8x32xf32>
    %298 = arith.mulf %293, %296 : vector<8x32xf32>
    %299 = arith.addf %297, %298 : vector<8x32xf32>
    %300 = math.tanh %299 : vector<8x32xf32>
    %301 = arith.mulf %295, %300 : vector<8x32xf32>
    %c48_89 = arith.constant 48 : index
    %c0_90 = arith.constant 0 : index
    %302 = vector.load %arg10[%c48_89, %c0_90] : memref<64x128xf32, #tpu.memory_space<vmem>>, vector<8x128xf32>
    %303 = arith.truncf %301 : vector<8x32xf32> to vector<8x32xbf16>
    %cst_91 = arith.constant dense<0.000000e+00> : vector<8x128xf32>
    %304 = tpu.matmul %303, %179, %cst_91 {dimension_numbers = #tpu.dot_dimension_numbers<[1], [0], [0], [1], [0, 0, 1, 1], [], []>} : vector<8x32xbf16>, vector<32x128xbf16>, vector<8x128xf32> -> vector<8x128xf32>
    %305 = arith.addf %302, %304 : vector<8x128xf32>
    %306 = arith.negf %305 : vector<8x128xf32>
    %307 = math.exp %306 : vector<8x128xf32>
    %cst_92 = arith.constant 1.000000e+00 : f32
    %308 = vector.broadcast %cst_92 : f32 to vector<8x128xf32>
    %309 = arith.addf %308, %307 : vector<8x128xf32>
    %310 = arith.divf %308, %309 : vector<8x128xf32>
    %311 = math.tanh %305 : vector<8x128xf32>
    %312 = vector.extract_strided_slice %310 {offsets = [0, 0], sizes = [8, 32], strides = [1, 1]} : vector<8x128xf32> to vector<8x32xf32>
    %313 = vector.extract_strided_slice %310 {offsets = [0, 32], sizes = [8, 32], strides = [1, 1]} : vector<8x128xf32> to vector<8x32xf32>
    %314 = vector.extract_strided_slice %310 {offsets = [0, 96], sizes = [8, 32], strides = [1, 1]} : vector<8x128xf32> to vector<8x32xf32>
    %315 = vector.extract_strided_slice %311 {offsets = [0, 64], sizes = [8, 32], strides = [1, 1]} : vector<8x128xf32> to vector<8x32xf32>
    %316 = arith.mulf %313, %299 : vector<8x32xf32>
    %317 = arith.mulf %312, %315 : vector<8x32xf32>
    %318 = arith.addf %316, %317 : vector<8x32xf32>
    %319 = math.tanh %318 : vector<8x32xf32>
    %320 = arith.mulf %314, %319 : vector<8x32xf32>
    %c56_93 = arith.constant 56 : index
    %c0_94 = arith.constant 0 : index
    %321 = vector.load %arg10[%c56_93, %c0_94] : memref<64x128xf32, #tpu.memory_space<vmem>>, vector<8x128xf32>
    %322 = arith.truncf %320 : vector<8x32xf32> to vector<8x32xbf16>
    %cst_95 = arith.constant dense<0.000000e+00> : vector<8x128xf32>
    %323 = tpu.matmul %322, %179, %cst_95 {dimension_numbers = #tpu.dot_dimension_numbers<[1], [0], [0], [1], [0, 0, 1, 1], [], []>} : vector<8x32xbf16>, vector<32x128xbf16>, vector<8x128xf32> -> vector<8x128xf32>
    %324 = arith.addf %321, %323 : vector<8x128xf32>
    %325 = arith.negf %324 : vector<8x128xf32>
    %326 = math.exp %325 : vector<8x128xf32>
    %cst_96 = arith.constant 1.000000e+00 : f32
    %327 = vector.broadcast %cst_96 : f32 to vector<8x128xf32>
    %328 = arith.addf %327, %326 : vector<8x128xf32>
    %329 = arith.divf %327, %328 : vector<8x128xf32>
    %330 = math.tanh %324 : vector<8x128xf32>
    %331 = vector.extract_strided_slice %329 {offsets = [0, 0], sizes = [8, 32], strides = [1, 1]} : vector<8x128xf32> to vector<8x32xf32>
    %332 = vector.extract_strided_slice %329 {offsets = [0, 32], sizes = [8, 32], strides = [1, 1]} : vector<8x128xf32> to vector<8x32xf32>
    %333 = vector.extract_strided_slice %329 {offsets = [0, 96], sizes = [8, 32], strides = [1, 1]} : vector<8x128xf32> to vector<8x32xf32>
    %334 = vector.extract_strided_slice %330 {offsets = [0, 64], sizes = [8, 32], strides = [1, 1]} : vector<8x128xf32> to vector<8x32xf32>
    %335 = arith.mulf %332, %318 : vector<8x32xf32>
    %336 = arith.mulf %331, %334 : vector<8x32xf32>
    %337 = arith.addf %335, %336 : vector<8x32xf32>
    %338 = math.tanh %337 : vector<8x32xf32>
    %339 = arith.mulf %333, %338 : vector<8x32xf32>
    %340 = arith.truncf %339 : vector<8x32xf32> to vector<8x32xbf16>
    %c0_97 = arith.constant 0 : index
    %c0_98 = arith.constant 0 : index
    %341 = vector.load %arg7[%c0_97, %c0_98] : memref<32x128xbf16, #tpu.memory_space<vmem>>, vector<32x128xbf16>
    %cst_99 = arith.constant dense<0.000000e+00> : vector<8x128xf32>
    %342 = tpu.matmul %340, %341, %cst_99 {dimension_numbers = #tpu.dot_dimension_numbers<[1], [0], [0], [1], [0, 0, 1, 1], [], []>} : vector<8x32xbf16>, vector<32x128xbf16>, vector<8x128xf32> -> vector<8x128xf32>
    %c0_100 = arith.constant 0 : index
    %c0_101 = arith.constant 0 : index
    %343 = vector.load %arg8[%c0_100, %c0_101] : memref<1x128xf32, #tpu.memory_space<vmem>>, vector<1x128xf32>
    %344 = vector.broadcast %343 : vector<1x128xf32> to vector<8x128xf32>
    %345 = arith.addf %342, %344 : vector<8x128xf32>
    %c0_102 = arith.constant 0 : index
    %c0_103 = arith.constant 0 : index
    %346 = vector.load %arg9[%c0_102, %c0_103] : memref<8x128xf32, #tpu.memory_space<vmem>>, vector<8x128xf32>
    tpu.vector_store %arg9[%c0_102, %c0_103], %345 {strides = array<i32>} : memref<8x128xf32, #tpu.memory_space<vmem>>, vector<8x128xf32>,
    return
  }
}

</mosaic_0001>

<llo_original>
// kernel: tpu_custom_call.1
$region0: #{tpu_custom_call.1}
  #allocation0 [shape = 'u32[]', space=smem, size = 0x4, offset = 0x4, fixed_abs, tag = 'smem constant byte address 0x4 - core index']
  #allocation1 [shape = 'u32[144,128]{1,0:T(1,128)}', space=vmem, size = 0x12000, scoped, tag = 'internal scratch']
  #allocation2 [shape = 'f32[64,128]{1,0:T(8,128)}', space=vmem, size = 0x8000, scoped, tag = 'scratch operand']
  #allocation3 [shape = 'bf16[64,32]{1,0:T(16,128)(2,1)}', space=vmem, size = 0x4000, scoped, tag = 'scratch operand']
  %s0 = inlined_call_operand.vmem [shape: bf16[64,16], index: 0, kind: input, shape index: {}]
  %s1 = inlined_call_operand.hbm [shape: bf16[16,128], index: 1, kind: input, shape index: {}]
  %s2 = inlined_call_operand.vmem [shape: bf16[32,128], index: 2, kind: input, shape index: {}]
  %s3 = inlined_call_operand.vmem [shape: f32[1,128], index: 3, kind: input, shape index: {}]
  %s4 = inlined_call_operand.vmem [shape: bf16[32,128], index: 4, kind: input, shape index: {}]
  %s5 = inlined_call_operand.vmem [shape: bf16[32,128], index: 5, kind: input, shape index: {}]
  %s6 = inlined_call_operand.vmem [shape: f32[1,128], index: 6, kind: input, shape index: {}]
  %s7 = inlined_call_operand.vmem [shape: bf16[32,128], index: 7, kind: input, shape index: {}]
  %s8 = inlined_call_operand.vmem [shape: f32[1,128], index: 8, kind: input, shape index: {}]
  %s9 = inlined_call_operand.hbm [shape: f32[8,128], index: 9, kind: output, shape index: {}]
  %s10 = sld [smem:[#allocation0]]
  $region50: #{tpu_custom_call.1} parent=0
    _
  %s12 = ssub.s32 1, %s10
  %s13 = scalar_select 0, %s12, %s10
  $region1: #{tpu_custom_call.1} parent=0
    #allocation4 [shape = 'u8[4096]{0}', space=vmem, size = 0x1000, scoped, tag = 'input window, operand 1, single buffered']
    #allocation5 [shape = 's32[1]{0}', space=sflag, size = 0x4, scoped, tag = 'scoped memory for tpu_custom_call.1']
    #allocation6 [shape = 's32[1]{0}', space=sflag, size = 0x4, scoped, tag = 'scoped memory for tpu_custom_call.1']
    #allocation7 [shape = 'u8[4096]{0}', space=vmem, size = 0x1000, scoped, tag = 'output window, operand 0, single buffered']
    %14 = vsyncpa [#allocation5], 0
    %15 = vsyncpa [#allocation6], 0
    // Predicated region
    $region2: #{tpu_custom_call.1} parent=1 // pred_check
      _
    $region3: #{tpu_custom_call.1} parent=1 // pred_check_branch
      %17 = sbr.rel (0) target = $region5
    $region4: #{tpu_custom_call.1} parent=1 // pred_region
      _
    $region5: #{tpu_custom_call.1} parent=1 // pred_fallthru
      _
    // Predicated region
    $region6: #{tpu_custom_call.1} parent=1 // pred_check
      _
    $region7: #{tpu_custom_call.1} parent=1 // pred_check_branch
      %19 = sbr.rel (0) target = $region9
    $region8: #{tpu_custom_call.1} parent=1 // pred_region
      %s21 = ssub.s32 128, 128
      %22 = vsyncadd [#allocation5], %s21
      %s23 = sshll.u32 [#allocation4], 4
      %s24 = int_to_ptr.vmem [resolvable:$true] %s23
      %29 = dma.hbm_to_vmem [thread:$0]  %s1, 128, %s24, [#allocation5], 64, 64, 4
    $region9: #{tpu_custom_call.1} parent=1 // pred_fallthru
      _
    // Predicated region
    $region10: #{tpu_custom_call.1} parent=1 // pred_check
      _
    $region11: #{tpu_custom_call.1} parent=1 // pred_check_branch
      %31 = sbr.rel (0) target = $region13
    $region12: #{tpu_custom_call.1} parent=1 // pred_region
      _
    $region13: #{tpu_custom_call.1} parent=1 // pred_fallthru
      _
    // Predicated region
    $region14: #{tpu_custom_call.1} parent=1 // pred_check
      _
    $region15: #{tpu_custom_call.1} parent=1 // pred_check_branch
      %33 = sbr.rel (0) target = $region17
    $region16: #{tpu_custom_call.1} parent=1 // pred_region
      _
    $region17: #{tpu_custom_call.1} parent=1 // pred_fallthru
      _
    // Predicated region
    $region18: #{tpu_custom_call.1} parent=1 // pred_check
      _
    $region19: #{tpu_custom_call.1} parent=1 // pred_check_branch
      %35 = sbr.rel (0) target = $region21
    $region20: #{tpu_custom_call.1} parent=1 // pred_region
      _
    $region21: #{tpu_custom_call.1} parent=1 // pred_fallthru
      _
    // Predicated region
    $region22: #{tpu_custom_call.1} parent=1 // pred_check
      _
    $region23: #{tpu_custom_call.1} parent=1 // pred_check_branch
      %37 = sbr.rel (0) target = $region25
    $region24: #{tpu_custom_call.1} parent=1 // pred_region
      _
    $region25: #{tpu_custom_call.1} parent=1 // pred_fallthru
      _
    // Predicated region
    $region26: #{tpu_custom_call.1} parent=1 // pred_check
      _
    $region27: #{tpu_custom_call.1} parent=1 // pred_check_branch
      %39 = sbr.rel (0) target = $region29
    $region28: #{tpu_custom_call.1} parent=1 // pred_region
      _
    $region29: #{tpu_custom_call.1} parent=1 // pred_fallthru
      _
    // Predicated region
    $region30: #{tpu_custom_call.1} parent=1 // pred_check
      _
    $region31: #{tpu_custom_call.1} parent=1 // pred_check_branch
      %41 = sbr.rel (0) target = $region33
    $region32: #{tpu_custom_call.1} parent=1 // pred_region
      _
    $region33: #{tpu_custom_call.1} parent=1 // pred_fallthru
      _
    // Predicated region
    $region34: #{tpu_custom_call.1} parent=1 // pred_check
      _
    $region35: #{tpu_custom_call.1} parent=1 // pred_check_branch
      %43 = sbr.rel (0) target = $region37
    $region36: #{tpu_custom_call.1} parent=1 // pred_region
      _
    $region37: #{tpu_custom_call.1} parent=1 // pred_fallthru
      _
    // Predicated region
    $region38: #{tpu_custom_call.1} parent=1 // pred_check
      _
    $region39: #{tpu_custom_call.1} parent=1 // pred_check_branch
      %45 = sbr.rel (0) target = $region41
    $region40: #{tpu_custom_call.1} parent=1 // pred_region
      %46 = dma.done [#allocation5], 128
    $region41: #{tpu_custom_call.1} parent=1 // pred_fallthru
      _
    %v48 = vld [vmem:[#allocation4] sm:$0xf]
    %v49 = vld [vmem:[#allocation4 + $0x4] sm:$0xf]
    %v50 = vld [vmem:[%s2] sm:$0xf]
    %v51 = vld [vmem:[%s2 + $0x4] sm:$0xf]
    %v52 = vld [vmem:[%s2 + $0x8] sm:$0xf]
    %v53 = vld [vmem:[%s2 + $0xc] sm:$0xf]
    %v54 = vld [vmem:[%s3] sm:$0x1]
    %v55 = vld [vmem:[%s0] sm:$0xf]
    %v56 = vld [vmem:[%s0 + $0x4] sm:$0xf]
    %v57 = vld [vmem:[%s0 + $0x8] sm:$0xf]
    %v58 = vld [vmem:[%s0 + $0xc] sm:$0xf]
    %v59 = vld [vmem:[%s0 + $0x10] sm:$0xf]
    %v60 = vld [vmem:[%s0 + $0x14] sm:$0xf]
    %v61 = vld [vmem:[%s0 + $0x18] sm:$0xf]
    %v62 = vld [vmem:[%s0 + $0x1c] sm:$0xf]
    %v64 = vlaneseq
    %v65 = vshrl.u32 %v64, 7
    %v66 = vsub.s32 0, %v65
    %v67 = vrot.slane %v54, %v66
    %v77 = vunpack.c.l.b16 %v55
    %v78 = vunpack.c.l.b16 %v56
    %v79 = vunpack.c.l.b16 %v57
    %v80 = vunpack.c.l.b16 %v58
    %v81 = vunpack.c.l.b16 %v59
    %v82 = vunpack.c.l.b16 %v60
    %v83 = vunpack.c.l.b16 %v61
    %v84 = vunpack.c.l.b16 %v62
    %v85 = vpack.c.b16 %v78, %v77
    %v86 = vpack.c.b16 %v80, %v79
    %v87 = vpack.c.b16 %v82, %v81
    %v88 = vpack.c.b16 %v84, %v83
    %v91 = vunpack.c.l.b16 %v48
    %v92 = vunpack.c.l.b16 %v49
    %v93 = vpack.c.b16 %v92, %v91
    %vm95 = vcmask 130048
    %v97 = vsel %vm95, %v85, 0
    %v100 = vsel %vm95, %v86, 0
    %v103 = vsel %vm95, %v87, 0
    %v106 = vsel %vm95, %v88, 0
    %108 = vmatprep.subr.bf16.mxu0 0
    %109 = vmatpush1.bf16.msra.mxu0 %v93
    %110 = vmatprep.subr.bf16.mxu0 0
    %111 = vmatpush1.bf16.msra.mxu0 0
    %112 = vmatprep.subr.bf16.mxu0 0
    %113 = vmatpush1.bf16.msra.mxu0 0
    %114 = vmatprep.subr.bf16.mxu0 0
    %115 = vmatpush1.bf16.msra.mxu0 0
    %116 = vmatprep.subr.bf16.mxu0 0
    %117 = vmatpush1.bf16.msra.mxu0 0
    %118 = vmatprep.subr.bf16.mxu0 0
    %119 = vmatpush1.bf16.msra.mxu0 0
    %120 = vmatprep.subr.bf16.mxu0 0
    %121 = vmatpush1.bf16.msra.mxu0 0
    %122 = vmatprep.subr.bf16.mxu0 0
    %123 = vmatpush1.bf16.msra.mxu0 0
    %124 = vmatprep.subr.bf16.mxu0 0
    %125 = vmatpush1.bf16.msra.mxu0 0
    %126 = vmatprep.subr.bf16.mxu0 0
    %127 = vmatpush1.bf16.msra.mxu0 0
    %128 = vmatprep.subr.bf16.mxu0 0
    %129 = vmatpush1.bf16.msra.mxu0 0
    %130 = vmatprep.subr.bf16.mxu0 0
    %131 = vmatpush1.bf16.msra.mxu0 0
    %132 = vmatprep.subr.bf16.mxu0 0
    %133 = vmatpush1.bf16.msra.mxu0 0
    %134 = vmatprep.subr.bf16.mxu0 0
    %135 = vmatpush1.bf16.msra.mxu0 0
    %136 = vmatprep.subr.bf16.mxu0 0
    %137 = vmatpush1.bf16.msra.mxu0 0
    %138 = vmatprep.subr.bf16.mxu0 0
    %139 = vmatpush1.bf16.msra.mxu0 0
    %140 = vmatprep.mubr.bf16.mxu0 0
    %141 = vmatmul.mubr.bf16.gmra.mrb[0].mxu0 %v97
    %v142 = vpop.f32.mrb[0].mxu0
    %v143 = vadd.f32 %v67, %v142
    %v144 = vpop.f32.mrb[0].mxu0
    %v145 = vpop.f32.mrb[0].mxu0
    %v146 = vadd.f32 %v67, %v145
    %v147 = vpop.f32.mrb[0].mxu0
    %148 = vmatprep.mubr.bf16.mxu0 0
    %149 = vmatmul.mubr.bf16.gmra.mrb[0].mxu0 %v100
    %v150 = vpop.f32.mrb[0].mxu0
    %v151 = vadd.f32 %v67, %v150
    %v152 = vpop.f32.mrb[0].mxu0
    %v153 = vpop.f32.mrb[0].mxu0
    %v154 = vadd.f32 %v67, %v153
    %v155 = vpop.f32.mrb[0].mxu0
    %156 = vmatprep.mubr.bf16.mxu0 0
    %157 = vmatmul.mubr.bf16.gmra.mrb[0].mxu0 %v103
    %v158 = vpop.f32.mrb[0].mxu0
    %v159 = vadd.f32 %v67, %v158
    %v160 = vpop.f32.mrb[0].mxu0
    %v161 = vpop.f32.mrb[0].mxu0
    %v162 = vadd.f32 %v67, %v161
    %v163 = vpop.f32.mrb[0].mxu0
    %164 = vmatprep.mubr.bf16.mxu0 0
    %165 = vmatmul.mubr.bf16.gmra.mrb[0].mxu0 %v106
    %v166 = vpop.f32.mrb[0].mxu0
    %v167 = vadd.f32 %v67, %v166
    %v168 = vpop.f32.mrb[0].mxu0
    %v169 = vpop.f32.mrb[0].mxu0
    %v170 = vadd.f32 %v67, %v169
    %v171 = vpop.f32.mrb[0].mxu0
    %172 = vdwg.mxu0
    %173 = vst [vmem:[#allocation2] sm:$0xff] %v143
    %174 = vst [vmem:[#allocation2 + $0x8] sm:$0xff] %v146
    %175 = vst [vmem:[#allocation2 + $0x10] sm:$0xff] %v151
    %176 = vst [vmem:[#allocation2 + $0x18] sm:$0xff] %v154
    %177 = vst [vmem:[#allocation2 + $0x20] sm:$0xff] %v159
    %178 = vst [vmem:[#allocation2 + $0x28] sm:$0xff] %v162
    %179 = vst [vmem:[#allocation2 + $0x30] sm:$0xff] %v167
    %180 = vst [vmem:[#allocation2 + $0x38] sm:$0xff] %v170
    %v181 = vld [vmem:[#allocation2] sm:$0xff]
    %v186 = vunpack.c.l.b16 %v50
    %v187 = vunpack.c.l.b16 %v51
    %v188 = vunpack.c.l.b16 %v52
    %v189 = vunpack.c.l.b16 %v53
    %v190 = vpack.c.b16 %v187, %v186
    %v191 = vpack.c.b16 %v189, %v188
    %vm194 = vcmask 261120
    %v196 = vsel %vm194, 0, 0
    %198 = vmatprep.subr.bf16.mxu0 0
    %199 = vmatpush1.bf16.msra.mxu0 %v190
    %200 = vmatprep.subr.bf16.mxu0 0
    %201 = vmatpush1.bf16.msra.mxu0 %v191
    %202 = vmatprep.subr.bf16.mxu0 0
    %203 = vmatpush1.bf16.msra.mxu0 0
    %204 = vmatprep.subr.bf16.mxu0 0
    %205 = vmatpush1.bf16.msra.mxu0 0
    %206 = vmatprep.subr.bf16.mxu0 0
    %207 = vmatpush1.bf16.msra.mxu0 0
    %208 = vmatprep.subr.bf16.mxu0 0
    %209 = vmatpush1.bf16.msra.mxu0 0
    %210 = vmatprep.subr.bf16.mxu0 0
    %211 = vmatpush1.bf16.msra.mxu0 0
    %212 = vmatprep.subr.bf16.mxu0 0
    %213 = vmatpush1.bf16.msra.mxu0 0
    %214 = vmatprep.subr.bf16.mxu0 0
    %215 = vmatpush1.bf16.msra.mxu0 0
    %216 = vmatprep.subr.bf16.mxu0 0
    %217 = vmatpush1.bf16.msra.mxu0 0
    %218 = vmatprep.subr.bf16.mxu0 0
    %219 = vmatpush1.bf16.msra.mxu0 0
    %220 = vmatprep.subr.bf16.mxu0 0
    %221 = vmatpush1.bf16.msra.mxu0 0
    %222 = vmatprep.subr.bf16.mxu0 0
    %223 = vmatpush1.bf16.msra.mxu0 0
    %224 = vmatprep.subr.bf16.mxu0 0
    %225 = vmatpush1.bf16.msra.mxu0 0
    %226 = vmatprep.subr.bf16.mxu0 0
    %227 = vmatpush1.bf16.msra.mxu0 0
    %228 = vmatprep.subr.bf16.mxu0 0
    %229 = vmatpush1.bf16.msra.mxu0 0
    %230 = vmatprep.mubr.bf16.mxu0 0
    %231 = vmatmul.mubr.bf16.gmra.mrb[0].mxu0 %v196
    %v232 = vpop.f32.mrb[0].mxu0
    %v233 = vadd.f32 0.0, %v232
    %v234 = vpop.f32.mrb[0].mxu0
    %v235 = vpop.f32.mrb[0].mxu0
    %v236 = vpop.f32.mrb[0].mxu0
    %237 = vdwg.mxu0
    %v238 = vadd.f32 %v181, %v233
    %v239 = vxor.u32 %v238, 2147483648
    %v240 = vmul.f32 %v239, 1.442695
    %v241 = vpow.pop %v240
    %v242 = vadd.f32 %v241, 1.0
    %v243 = vrcp.pop %v242
    %v244 = vmul.f32 1.0, %v243
    %v245 = vtanh.pop %v238
    %v246 = vmul.f32 %v244, 0.0
    %248 = vrot.lane.b32.xlu0 %v245, 64
    %v249 = vpop.permute.xlu0 %248
    %v251 = vmul.f32 %v244, %v249
    %253 = vrot.lane.b32.xlu0 %v251, 32
    %v254 = vpop.permute.xlu0 %253
    %v256 = vadd.f32 %v246, %v254
    %v257 = vtanh.pop %v256
    %259 = vrot.lane.b32.xlu0 %v257, 64
    %v260 = vpop.permute.xlu0 %259
    %v262 = vmul.f32 %v244, %v260
    %v263 = vpack.c.bf16 %v262, %v262
    %265 = vrot.lane.b32.xlu0 %v263, 32
    %v266 = vpop.permute.xlu0 %265
    %vm268 = vcmask 257024
    %269 = vst.msk [vmem:[#allocation3] sm:$0xf] %vm268, %v266
    %v270 = vld [vmem:[#allocation2 + $0x8] sm:$0xff]
    %v272 = vsel %vm194, %v266, 0
    %274 = vmatprep.subr.bf16.mxu0 0
    %275 = vmatpush1.bf16.msra.mxu0 %v190
    %276 = vmatprep.subr.bf16.mxu0 0
    %277 = vmatpush1.bf16.msra.mxu0 %v191
    %278 = vmatprep.subr.bf16.mxu0 0
    %279 = vmatpush1.bf16.msra.mxu0 0
    %280 = vmatprep.subr.bf16.mxu0 0
    %281 = vmatpush1.bf16.msra.mxu0 0
    %282 = vmatprep.subr.bf16.mxu0 0
    %283 = vmatpush1.bf16.msra.mxu0 0
    %284 = vmatprep.subr.bf16.mxu0 0
    %285 = vmatpush1.bf16.msra.mxu0 0
    %286 = vmatprep.subr.bf16.mxu0 0
    %287 = vmatpush1.bf16.msra.mxu0 0
    %288 = vmatprep.subr.bf16.mxu0 0
    %289 = vmatpush1.bf16.msra.mxu0 0
    %290 = vmatprep.subr.bf16.mxu0 0
    %291 = vmatpush1.bf16.msra.mxu0 0
    %292 = vmatprep.subr.bf16.mxu0 0
    %293 = vmatpush1.bf16.msra.mxu0 0
    %294 = vmatprep.subr.bf16.mxu0 0
    %295 = vmatpush1.bf16.msra.mxu0 0
    %296 = vmatprep.subr.bf16.mxu0 0
    %297 = vmatpush1.bf16.msra.mxu0 0
    %298 = vmatprep.subr.bf16.mxu0 0
    %299 = vmatpush1.bf16.msra.mxu0 0
    %300 = vmatprep.subr.bf16.mxu0 0
    %301 = vmatpush1.bf16.msra.mxu0 0
    %302 = vmatprep.subr.bf16.mxu0 0
    %303 = vmatpush1.bf16.msra.mxu0 0
    %304 = vmatprep.subr.bf16.mxu0 0
    %305 = vmatpush1.bf16.msra.mxu0 0
    %306 = vmatprep.mubr.bf16.mxu0 0
    %307 = vmatmul.mubr.bf16.gmra.mrb[0].mxu0 %v272
    %v308 = vpop.f32.mrb[0].mxu0
    %v309 = vadd.f32 0.0, %v308
    %v310 = vpop.f32.mrb[0].mxu0
    %v311 = vpop.f32.mrb[0].mxu0
    %v312 = vpop.f32.mrb[0].mxu0
    %313 = vdwg.mxu0
    %v314 = vadd.f32 %v270, %v309
    %v315 = vxor.u32 %v314, 2147483648
    %v316 = vmul.f32 %v315, 1.442695
    %v317 = vpow.pop %v316
    %v318 = vadd.f32 %v317, 1.0
    %v319 = vrcp.pop %v318
    %v320 = vmul.f32 1.0, %v319
    %v321 = vtanh.pop %v314
    %v322 = vmul.f32 %v320, %v256
    %324 = vrot.lane.b32.xlu0 %v321, 64
    %v325 = vpop.permute.xlu0 %324
    %v327 = vmul.f32 %v320, %v325
    %329 = vrot.lane.b32.xlu0 %v327, 32
    %v330 = vpop.permute.xlu0 %329
    %v332 = vadd.f32 %v322, %v330
    %v333 = vtanh.pop %v332
    %335 = vrot.lane.b32.xlu0 %v333, 64
    %v336 = vpop.permute.xlu0 %335
    %v338 = vmul.f32 %v320, %v336
    %v339 = vpack.c.bf16 %v338, %v338
    %v341 = vrot.slane %v339, 4
    %342 = vrot.lane.b32.xlu0 %v341, 32
    %v343 = vpop.permute.xlu0 %342
    %vm345 = vcmask 261124
    %346 = vst.msk [vmem:[#allocation3] sm:$0xf0] %vm345, %v343
    %v347 = vld [vmem:[#allocation2 + $0x10] sm:$0xff]
    %348 = vrot.lane.b32.xlu0 %v339, 32
    %v349 = vpop.permute.xlu0 %348
    %v351 = vsel %vm194, %v349, 0
    %353 = vmatprep.subr.bf16.mxu0 0
    %354 = vmatpush1.bf16.msra.mxu0 %v190
    %355 = vmatprep.subr.bf16.mxu0 0
    %356 = vmatpush1.bf16.msra.mxu0 %v191
    %357 = vmatprep.subr.bf16.mxu0 0
    %358 = vmatpush1.bf16.msra.mxu0 0
    %359 = vmatprep.subr.bf16.mxu0 0
    %360 = vmatpush1.bf16.msra.mxu0 0
    %361 = vmatprep.subr.bf16.mxu0 0
    %362 = vmatpush1.bf16.msra.mxu0 0
    %363 = vmatprep.subr.bf16.mxu0 0
    %364 = vmatpush1.bf16.msra.mxu0 0
    %365 = vmatprep.subr.bf16.mxu0 0
    %366 = vmatpush1.bf16.msra.mxu0 0
    %367 = vmatprep.subr.bf16.mxu0 0
    %368 = vmatpush1.bf16.msra.mxu0 0
    %369 = vmatprep.subr.bf16.mxu0 0
    %370 = vmatpush1.bf16.msra.mxu0 0
    %371 = vmatprep.subr.bf16.mxu0 0
    %372 = vmatpush1.bf16.msra.mxu0 0
    %373 = vmatprep.subr.bf16.mxu0 0
    %374 = vmatpush1.bf16.msra.mxu0 0
    %375 = vmatprep.subr.bf16.mxu0 0
    %376 = vmatpush1.bf16.msra.mxu0 0
    %377 = vmatprep.subr.bf16.mxu0 0
    %378 = vmatpush1.bf16.msra.mxu0 0
    %379 = vmatprep.subr.bf16.mxu0 0
    %380 = vmatpush1.bf16.msra.mxu0 0
    %381 = vmatprep.subr.bf16.mxu0 0
    %382 = vmatpush1.bf16.msra.mxu0 0
    %383 = vmatprep.subr.bf16.mxu0 0
    %384 = vmatpush1.bf16.msra.mxu0 0
    %385 = vmatprep.mubr.bf16.mxu0 0
    %386 = vmatmul.mubr.bf16.gmra.mrb[0].mxu0 %v351
    %v387 = vpop.f32.mrb[0].mxu0
    %v388 = vadd.f32 0.0, %v387
    %v389 = vpop.f32.mrb[0].mxu0
    %v390 = vpop.f32.mrb[0].mxu0
    %v391 = vpop.f32.mrb[0].mxu0
    %392 = vdwg.mxu0
    %v393 = vadd.f32 %v347, %v388
    %v394 = vxor.u32 %v393, 2147483648
    %v395 = vmul.f32 %v394, 1.442695
    %v396 = vpow.pop %v395
    %v397 = vadd.f32 %v396, 1.0
    %v398 = vrcp.pop %v397
    %v399 = vmul.f32 1.0, %v398
    %v400 = vtanh.pop %v393
    %v401 = vmul.f32 %v399, %v332
    %403 = vrot.lane.b32.xlu0 %v400, 64
    %v404 = vpop.permute.xlu0 %403
    %v406 = vmul.f32 %v399, %v404
    %408 = vrot.lane.b32.xlu0 %v406, 32
    %v409 = vpop.permute.xlu0 %408
    %v411 = vadd.f32 %v401, %v409
    %v412 = vtanh.pop %v411
    %414 = vrot.lane.b32.xlu0 %v412, 64
    %v415 = vpop.permute.xlu0 %414
    %v417 = vmul.f32 %v399, %v415
    %v418 = vpack.c.bf16 %v417, %v417
    %420 = vrot.lane.b32.xlu0 %v418, 32
    %v421 = vpop.permute.xlu0 %420
    %423 = vst.msk [vmem:[#allocation3 + $0x8] sm:$0xf] %vm268, %v421
    %v424 = vld [vmem:[#allocation2 + $0x18] sm:$0xff]
    %v426 = vsel %vm194, %v421, 0
    %428 = vmatprep.subr.bf16.mxu0 0
    %429 = vmatpush1.bf16.msra.mxu0 %v190
    %430 = vmatprep.subr.bf16.mxu0 0
    %431 = vmatpush1.bf16.msra.mxu0 %v191
    %432 = vmatprep.subr.bf16.mxu0 0
    %433 = vmatpush1.bf16.msra.mxu0 0
    %434 = vmatprep.subr.bf16.mxu0 0
    %435 = vmatpush1.bf16.msra.mxu0 0
    %436 = vmatprep.subr.bf16.mxu0 0
    %437 = vmatpush1.bf16.msra.mxu0 0
    %438 = vmatprep.subr.bf16.mxu0 0
    %439 = vmatpush1.bf16.msra.mxu0 0
    %440 = vmatprep.subr.bf16.mxu0 0
    %441 = vmatpush1.bf16.msra.mxu0 0
    %442 = vmatprep.subr.bf16.mxu0 0
    %443 = vmatpush1.bf16.msra.mxu0 0
    %444 = vmatprep.subr.bf16.mxu0 0
    %445 = vmatpush1.bf16.msra.mxu0 0
    %446 = vmatprep.subr.bf16.mxu0 0
    %447 = vmatpush1.bf16.msra.mxu0 0
    %448 = vmatprep.subr.bf16.mxu0 0
    %449 = vmatpush1.bf16.msra.mxu0 0
    %450 = vmatprep.subr.bf16.mxu0 0
    %451 = vmatpush1.bf16.msra.mxu0 0
    %452 = vmatprep.subr.bf16.mxu0 0
    %453 = vmatpush1.bf16.msra.mxu0 0
    %454 = vmatprep.subr.bf16.mxu0 0
    %455 = vmatpush1.bf16.msra.mxu0 0
    %456 = vmatprep.subr.bf16.mxu0 0
    %457 = vmatpush1.bf16.msra.mxu0 0
    %458 = vmatprep.subr.bf16.mxu0 0
    %459 = vmatpush1.bf16.msra.mxu0 0
    %460 = vmatprep.mubr.bf16.mxu0 0
    %461 = vmatmul.mubr.bf16.gmra.mrb[0].mxu0 %v426
    %v462 = vpop.f32.mrb[0].mxu0
    %v463 = vadd.f32 0.0, %v462
    %v464 = vpop.f32.mrb[0].mxu0
    %v465 = vpop.f32.mrb[0].mxu0
    %v466 = vpop.f32.mrb[0].mxu0
    %467 = vdwg.mxu0
    %v468 = vadd.f32 %v424, %v463
    %v469 = vxor.u32 %v468, 2147483648
    %v470 = vmul.f32 %v469, 1.442695
    %v471 = vpow.pop %v470
    %v472 = vadd.f32 %v471, 1.0
    %v473 = vrcp.pop %v472
    %v474 = vmul.f32 1.0, %v473
    %v475 = vtanh.pop %v468
    %v476 = vmul.f32 %v474, %v411
    %478 = vrot.lane.b32.xlu0 %v475, 64
    %v479 = vpop.permute.xlu0 %478
    %v481 = vmul.f32 %v474, %v479
    %483 = vrot.lane.b32.xlu0 %v481, 32
    %v484 = vpop.permute.xlu0 %483
    %v486 = vadd.f32 %v476, %v484
    %v487 = vtanh.pop %v486
    %489 = vrot.lane.b32.xlu0 %v487, 64
    %v490 = vpop.permute.xlu0 %489
    %v492 = vmul.f32 %v474, %v490
    %v493 = vpack.c.bf16 %v492, %v492
    %v495 = vrot.slane %v493, 4
    %496 = vrot.lane.b32.xlu0 %v495, 32
    %v497 = vpop.permute.xlu0 %496
    %499 = vst.msk [vmem:[#allocation3 + $0x8] sm:$0xf0] %vm345, %v497
    %v500 = vld [vmem:[#allocation2 + $0x20] sm:$0xff]
    %501 = vrot.lane.b32.xlu0 %v493, 32
    %v502 = vpop.permute.xlu0 %501
    %v504 = vsel %vm194, %v502, 0
    %506 = vmatprep.subr.bf16.mxu0 0
    %507 = vmatpush1.bf16.msra.mxu0 %v190
    %508 = vmatprep.subr.bf16.mxu0 0
    %509 = vmatpush1.bf16.msra.mxu0 %v191
    %510 = vmatprep.subr.bf16.mxu0 0
    %511 = vmatpush1.bf16.msra.mxu0 0
    %512 = vmatprep.subr.bf16.mxu0 0
    %513 = vmatpush1.bf16.msra.mxu0 0
    %514 = vmatprep.subr.bf16.mxu0 0
    %515 = vmatpush1.bf16.msra.mxu0 0
    %516 = vmatprep.subr.bf16.mxu0 0
    %517 = vmatpush1.bf16.msra.mxu0 0
    %518 = vmatprep.subr.bf16.mxu0 0
    %519 = vmatpush1.bf16.msra.mxu0 0
    %520 = vmatprep.subr.bf16.mxu0 0
    %521 = vmatpush1.bf16.msra.mxu0 0
    %522 = vmatprep.subr.bf16.mxu0 0
    %523 = vmatpush1.bf16.msra.mxu0 0
    %524 = vmatprep.subr.bf16.mxu0 0
    %525 = vmatpush1.bf16.msra.mxu0 0
    %526 = vmatprep.subr.bf16.mxu0 0
    %527 = vmatpush1.bf16.msra.mxu0 0
    %528 = vmatprep.subr.bf16.mxu0 0
    %529 = vmatpush1.bf16.msra.mxu0 0
    %530 = vmatprep.subr.bf16.mxu0 0
    %531 = vmatpush1.bf16.msra.mxu0 0
    %532 = vmatprep.subr.bf16.mxu0 0
    %533 = vmatpush1.bf16.msra.mxu0 0
    %534 = vmatprep.subr.bf16.mxu0 0
    %535 = vmatpush1.bf16.msra.mxu0 0
    %536 = vmatprep.subr.bf16.mxu0 0
    %537 = vmatpush1.bf16.msra.mxu0 0
    %538 = vmatprep.mubr.bf16.mxu0 0
    %539 = vmatmul.mubr.bf16.gmra.mrb[0].mxu0 %v504
    %v540 = vpop.f32.mrb[0].mxu0
    %v541 = vadd.f32 0.0, %v540
    %v542 = vpop.f32.mrb[0].mxu0
    %v543 = vpop.f32.mrb[0].mxu0
    %v544 = vpop.f32.mrb[0].mxu0
    %545 = vdwg.mxu0
    %v546 = vadd.f32 %v500, %v541
    %v547 = vxor.u32 %v546, 2147483648
    %v548 = vmul.f32 %v547, 1.442695
    %v549 = vpow.pop %v548
    %v550 = vadd.f32 %v549, 1.0
    %v551 = vrcp.pop %v550
    %v552 = vmul.f32 1.0, %v551
    %v553 = vtanh.pop %v546
    %v554 = vmul.f32 %v552, %v486
    %556 = vrot.lane.b32.xlu0 %v553, 64
    %v557 = vpop.permute.xlu0 %556
    %v559 = vmul.f32 %v552, %v557
    %561 = vrot.lane.b32.xlu0 %v559, 32
    %v562 = vpop.permute.xlu0 %561
    %v564 = vadd.f32 %v554, %v562
    %v565 = vtanh.pop %v564
    %567 = vrot.lane.b32.xlu0 %v565, 64
    %v568 = vpop.permute.xlu0 %567
    %v570 = vmul.f32 %v552, %v568
    %v571 = vpack.c.bf16 %v570, %v570
    %573 = vrot.lane.b32.xlu0 %v571, 32
    %v574 = vpop.permute.xlu0 %573
    %576 = vst.msk [vmem:[#allocation3 + $0x10] sm:$0xf] %vm268, %v574
    %v577 = vld [vmem:[#allocation2 + $0x28] sm:$0xff]
    %v579 = vsel %vm194, %v574, 0
    %581 = vmatprep.subr.bf16.mxu0 0
    %582 = vmatpush1.bf16.msra.mxu0 %v190
    %583 = vmatprep.subr.bf16.mxu0 0
    %584 = vmatpush1.bf16.msra.mxu0 %v191
    %585 = vmatprep.subr.bf16.mxu0 0
    %586 = vmatpush1.bf16.msra.mxu0 0
    %587 = vmatprep.subr.bf16.mxu0 0
    %588 = vmatpush1.bf16.msra.mxu0 0
    %589 = vmatprep.subr.bf16.mxu0 0
    %590 = vmatpush1.bf16.msra.mxu0 0
    %591 = vmatprep.subr.bf16.mxu0 0
    %592 = vmatpush1.bf16.msra.mxu0 0
    %593 = vmatprep.subr.bf16.mxu0 0
    %594 = vmatpush1.bf16.msra.mxu0 0
    %595 = vmatprep.subr.bf16.mxu0 0
    %596 = vmatpush1.bf16.msra.mxu0 0
    %597 = vmatprep.subr.bf16.mxu0 0
    %598 = vmatpush1.bf16.msra.mxu0 0
    %599 = vmatprep.subr.bf16.mxu0 0
    %600 = vmatpush1.bf16.msra.mxu0 0
    %601 = vmatprep.subr.bf16.mxu0 0
    %602 = vmatpush1.bf16.msra.mxu0 0
    %603 = vmatprep.subr.bf16.mxu0 0
    %604 = vmatpush1.bf16.msra.mxu0 0
    %605 = vmatprep.subr.bf16.mxu0 0
    %606 = vmatpush1.bf16.msra.mxu0 0
    %607 = vmatprep.subr.bf16.mxu0 0
    %608 = vmatpush1.bf16.msra.mxu0 0
    %609 = vmatprep.subr.bf16.mxu0 0
    %610 = vmatpush1.bf16.msra.mxu0 0
    %611 = vmatprep.subr.bf16.mxu0 0
    %612 = vmatpush1.bf16.msra.mxu0 0
    %613 = vmatprep.mubr.bf16.mxu0 0
    %614 = vmatmul.mubr.bf16.gmra.mrb[0].mxu0 %v579
    %v615 = vpop.f32.mrb[0].mxu0
    %v616 = vadd.f32 0.0, %v615
    %v617 = vpop.f32.mrb[0].mxu0
    %v618 = vpop.f32.mrb[0].mxu0
    %v619 = vpop.f32.mrb[0].mxu0
    %620 = vdwg.mxu0
    %v621 = vadd.f32 %v577, %v616
    %v622 = vxor.u32 %v621, 2147483648
    %v623 = vmul.f32 %v622, 1.442695
    %v624 = vpow.pop %v623
    %v625 = vadd.f32 %v624, 1.0
    %v626 = vrcp.pop %v625
    %v627 = vmul.f32 1.0, %v626
    %v628 = vtanh.pop %v621
    %v629 = vmul.f32 %v627, %v564
    %631 = vrot.lane.b32.xlu0 %v628, 64
    %v632 = vpop.permute.xlu0 %631
    %v634 = vmul.f32 %v627, %v632
    %636 = vrot.lane.b32.xlu0 %v634, 32
    %v637 = vpop.permute.xlu0 %636
    %v639 = vadd.f32 %v629, %v637
    %v640 = vtanh.pop %v639
    %642 = vrot.lane.b32.xlu0 %v640, 64
    %v643 = vpop.permute.xlu0 %642
    %v645 = vmul.f32 %v627, %v643
    %v646 = vpack.c.bf16 %v645, %v645
    %v648 = vrot.slane %v646, 4
    %649 = vrot.lane.b32.xlu0 %v648, 32
    %v650 = vpop.permute.xlu0 %649
    %652 = vst.msk [vmem:[#allocation3 + $0x10] sm:$0xf0] %vm345, %v650
    %v653 = vld [vmem:[#allocation2 + $0x30] sm:$0xff]
    %654 = vrot.lane.b32.xlu0 %v646, 32
    %v655 = vpop.permute.xlu0 %654
    %v657 = vsel %vm194, %v655, 0
    %659 = vmatprep.subr.bf16.mxu0 0
    %660 = vmatpush1.bf16.msra.mxu0 %v190
    %661 = vmatprep.subr.bf16.mxu0 0
    %662 = vmatpush1.bf16.msra.mxu0 %v191
    %663 = vmatprep.subr.bf16.mxu0 0
    %664 = vmatpush1.bf16.msra.mxu0 0
    %665 = vmatprep.subr.bf16.mxu0 0
    %666 = vmatpush1.bf16.msra.mxu0 0
    %667 = vmatprep.subr.bf16.mxu0 0
    %668 = vmatpush1.bf16.msra.mxu0 0
    %669 = vmatprep.subr.bf16.mxu0 0
    %670 = vmatpush1.bf16.msra.mxu0 0
    %671 = vmatprep.subr.bf16.mxu0 0
    %672 = vmatpush1.bf16.msra.mxu0 0
    %673 = vmatprep.subr.bf16.mxu0 0
    %674 = vmatpush1.bf16.msra.mxu0 0
    %675 = vmatprep.subr.bf16.mxu0 0
    %676 = vmatpush1.bf16.msra.mxu0 0
    %677 = vmatprep.subr.bf16.mxu0 0
    %678 = vmatpush1.bf16.msra.mxu0 0
    %679 = vmatprep.subr.bf16.mxu0 0
    %680 = vmatpush1.bf16.msra.mxu0 0
    %681 = vmatprep.subr.bf16.mxu0 0
    %682 = vmatpush1.bf16.msra.mxu0 0
    %683 = vmatprep.subr.bf16.mxu0 0
    %684 = vmatpush1.bf16.msra.mxu0 0
    %685 = vmatprep.subr.bf16.mxu0 0
    %686 = vmatpush1.bf16.msra.mxu0 0
    %687 = vmatprep.subr.bf16.mxu0 0
    %688 = vmatpush1.bf16.msra.mxu0 0
    %689 = vmatprep.subr.bf16.mxu0 0
    %690 = vmatpush1.bf16.msra.mxu0 0
    %691 = vmatprep.mubr.bf16.mxu0 0
    %692 = vmatmul.mubr.bf16.gmra.mrb[0].mxu0 %v657
    %v693 = vpop.f32.mrb[0].mxu0
    %v694 = vadd.f32 0.0, %v693
    %v695 = vpop.f32.mrb[0].mxu0
    %v696 = vpop.f32.mrb[0].mxu0
    %v697 = vpop.f32.mrb[0].mxu0
    %698 = vdwg.mxu0
    %v699 = vadd.f32 %v653, %v694
    %v700 = vxor.u32 %v699, 2147483648
    %v701 = vmul.f32 %v700, 1.442695
    %v702 = vpow.pop %v701
    %v703 = vadd.f32 %v702, 1.0
    %v704 = vrcp.pop %v703
    %v705 = vmul.f32 1.0, %v704
    %v706 = vtanh.pop %v699
    %v707 = vmul.f32 %v705, %v639
    %709 = vrot.lane.b32.xlu0 %v706, 64
    %v710 = vpop.permute.xlu0 %709
    %v712 = vmul.f32 %v705, %v710
    %714 = vrot.lane.b32.xlu0 %v712, 32
    %v715 = vpop.permute.xlu0 %714
    %v717 = vadd.f32 %v707, %v715
    %v718 = vtanh.pop %v717
    %720 = vrot.lane.b32.xlu0 %v718, 64
    %v721 = vpop.permute.xlu0 %720
    %v723 = vmul.f32 %v705, %v721
    %v724 = vpack.c.bf16 %v723, %v723
    %726 = vrot.lane.b32.xlu0 %v724, 32
    %v727 = vpop.permute.xlu0 %726
    %729 = vst.msk [vmem:[#allocation3 + $0x18] sm:$0xf] %vm268, %v727
    %v730 = vld [vmem:[#allocation2 + $0x38] sm:$0xff]
    %v732 = vsel %vm194, %v727, 0
    %734 = vmatprep.subr.bf16.mxu0 0
    %735 = vmatpush1.bf16.msra.mxu0 %v190
    %736 = vmatprep.subr.bf16.mxu0 0
    %737 = vmatpush1.bf16.msra.mxu0 %v191
    %738 = vmatprep.subr.bf16.mxu0 0
    %739 = vmatpush1.bf16.msra.mxu0 0
    %740 = vmatprep.subr.bf16.mxu0 0
    %741 = vmatpush1.bf16.msra.mxu0 0
    %742 = vmatprep.subr.bf16.mxu0 0
    %743 = vmatpush1.bf16.msra.mxu0 0
    %744 = vmatprep.subr.bf16.mxu0 0
    %745 = vmatpush1.bf16.msra.mxu0 0
    %746 = vmatprep.subr.bf16.mxu0 0
    %747 = vmatpush1.bf16.msra.mxu0 0
    %748 = vmatprep.subr.bf16.mxu0 0
    %749 = vmatpush1.bf16.msra.mxu0 0
    %750 = vmatprep.subr.bf16.mxu0 0
    %751 = vmatpush1.bf16.msra.mxu0 0
    %752 = vmatprep.subr.bf16.mxu0 0
    %753 = vmatpush1.bf16.msra.mxu0 0
    %754 = vmatprep.subr.bf16.mxu0 0
    %755 = vmatpush1.bf16.msra.mxu0 0
    %756 = vmatprep.subr.bf16.mxu0 0
    %757 = vmatpush1.bf16.msra.mxu0 0
    %758 = vmatprep.subr.bf16.mxu0 0
    %759 = vmatpush1.bf16.msra.mxu0 0
    %760 = vmatprep.subr.bf16.mxu0 0
    %761 = vmatpush1.bf16.msra.mxu0 0
    %762 = vmatprep.subr.bf16.mxu0 0
    %763 = vmatpush1.bf16.msra.mxu0 0
    %764 = vmatprep.subr.bf16.mxu0 0
    %765 = vmatpush1.bf16.msra.mxu0 0
    %766 = vmatprep.mubr.bf16.mxu0 0
    %767 = vmatmul.mubr.bf16.gmra.mrb[0].mxu0 %v732
    %v768 = vpop.f32.mrb[0].mxu0
    %v769 = vadd.f32 0.0, %v768
    %v770 = vpop.f32.mrb[0].mxu0
    %v771 = vpop.f32.mrb[0].mxu0
    %v772 = vpop.f32.mrb[0].mxu0
    %773 = vdwg.mxu0
    %v774 = vadd.f32 %v730, %v769
    %v775 = vxor.u32 %v774, 2147483648
    %v776 = vmul.f32 %v775, 1.442695
    %v777 = vpow.pop %v776
    %v778 = vadd.f32 %v777, 1.0
    %v779 = vrcp.pop %v778
    %v780 = vmul.f32 1.0, %v779
    %v781 = vtanh.pop %v774
    %v782 = vmul.f32 %v780, %v717
    %784 = vrot.lane.b32.xlu0 %v781, 64
    %v785 = vpop.permute.xlu0 %784
    %v787 = vmul.f32 %v780, %v785
    %789 = vrot.lane.b32.xlu0 %v787, 32
    %v790 = vpop.permute.xlu0 %789
    %v792 = vadd.f32 %v782, %v790
    %v793 = vtanh.pop %v792
    %795 = vrot.lane.b32.xlu0 %v793, 64
    %v796 = vpop.permute.xlu0 %795
    %v798 = vmul.f32 %v780, %v796
    %v799 = vpack.c.bf16 %v798, %v798
    %v801 = vrot.slane %v799, 4
    %802 = vrot.lane.b32.xlu0 %v801, 32
    %v803 = vpop.permute.xlu0 %802
    %805 = vst.msk [vmem:[#allocation3 + $0x18] sm:$0xf0] %vm345, %v803
    %v806 = vld [vmem:[%s4] sm:$0xf]
    %v807 = vld [vmem:[%s4 + $0x4] sm:$0xf]
    %v808 = vld [vmem:[%s4 + $0x8] sm:$0xf]
    %v809 = vld [vmem:[%s4 + $0xc] sm:$0xf]
    %v810 = vld [vmem:[%s5] sm:$0xf]
    %v811 = vld [vmem:[%s5 + $0x4] sm:$0xf]
    %v812 = vld [vmem:[%s5 + $0x8] sm:$0xf]
    %v813 = vld [vmem:[%s5 + $0xc] sm:$0xf]
    %v814 = vld [vmem:[%s6] sm:$0x1]
    %v815 = vld [vmem:[#allocation3] sm:$0xff]
    %v816 = vld [vmem:[#allocation3 + $0x8] sm:$0xff]
    %v817 = vld [vmem:[#allocation3 + $0x10] sm:$0xff]
    %v818 = vld [vmem:[#allocation3 + $0x18] sm:$0xff]
    %v820 = vlaneseq
    %v821 = vshrl.u32 %v820, 7
    %v822 = vsub.s32 0, %v821
    %v823 = vrot.slane %v814, %v822
    %v829 = vunpack.c.l.b16 %v806
    %v830 = vunpack.c.l.b16 %v807
    %v831 = vunpack.c.l.b16 %v808
    %v832 = vunpack.c.l.b16 %v809
    %v833 = vpack.c.b16 %v830, %v829
    %v834 = vpack.c.b16 %v832, %v831
    %v838 = vsel %vm194, %v815, 0
    %v841 = vsel %vm194, %v816, 0
    %v844 = vsel %vm194, %v817, 0
    %v847 = vsel %vm194, %v818, 0
    %849 = vmatprep.subr.bf16.mxu0 0
    %850 = vmatpush1.bf16.msra.mxu0 %v833
    %851 = vmatprep.subr.bf16.mxu0 0
    %852 = vmatpush1.bf16.msra.mxu0 %v834
    %853 = vmatprep.subr.bf16.mxu0 0
    %854 = vmatpush1.bf16.msra.mxu0 0
    %855 = vmatprep.subr.bf16.mxu0 0
    %856 = vmatpush1.bf16.msra.mxu0 0
    %857 = vmatprep.subr.bf16.mxu0 0
    %858 = vmatpush1.bf16.msra.mxu0 0
    %859 = vmatprep.subr.bf16.mxu0 0
    %860 = vmatpush1.bf16.msra.mxu0 0
    %861 = vmatprep.subr.bf16.mxu0 0
    %862 = vmatpush1.bf16.msra.mxu0 0
    %863 = vmatprep.subr.bf16.mxu0 0
    %864 = vmatpush1.bf16.msra.mxu0 0
    %865 = vmatprep.subr.bf16.mxu0 0
    %866 = vmatpush1.bf16.msra.mxu0 0
    %867 = vmatprep.subr.bf16.mxu0 0
    %868 = vmatpush1.bf16.msra.mxu0 0
    %869 = vmatprep.subr.bf16.mxu0 0
    %870 = vmatpush1.bf16.msra.mxu0 0
    %871 = vmatprep.subr.bf16.mxu0 0
    %872 = vmatpush1.bf16.msra.mxu0 0
    %873 = vmatprep.subr.bf16.mxu0 0
    %874 = vmatpush1.bf16.msra.mxu0 0
    %875 = vmatprep.subr.bf16.mxu0 0
    %876 = vmatpush1.bf16.msra.mxu0 0
    %877 = vmatprep.subr.bf16.mxu0 0
    %878 = vmatpush1.bf16.msra.mxu0 0
    %879 = vmatprep.subr.bf16.mxu0 0
    %880 = vmatpush1.bf16.msra.mxu0 0
    %881 = vmatprep.mubr.bf16.mxu0 0
    %882 = vmatmul.mubr.bf16.gmra.mrb[0].mxu0 %v838
    %v883 = vpop.f32.mrb[0].mxu0
    %v884 = vadd.f32 %v823, %v883
    %v885 = vpop.f32.mrb[0].mxu0
    %v886 = vpop.f32.mrb[0].mxu0
    %v887 = vadd.f32 %v823, %v886
    %v888 = vpop.f32.mrb[0].mxu0
    %889 = vmatprep.mubr.bf16.mxu0 0
    %890 = vmatmul.mubr.bf16.gmra.mrb[0].mxu0 %v841
    %v891 = vpop.f32.mrb[0].mxu0
    %v892 = vadd.f32 %v823, %v891
    %v893 = vpop.f32.mrb[0].mxu0
    %v894 = vpop.f32.mrb[0].mxu0
    %v895 = vadd.f32 %v823, %v894
    %v896 = vpop.f32.mrb[0].mxu0
    %897 = vmatprep.mubr.bf16.mxu0 0
    %898 = vmatmul.mubr.bf16.gmra.mrb[0].mxu0 %v844
    %v899 = vpop.f32.mrb[0].mxu0
    %v900 = vadd.f32 %v823, %v899
    %v901 = vpop.f32.mrb[0].mxu0
    %v902 = vpop.f32.mrb[0].mxu0
    %v903 = vadd.f32 %v823, %v902
    %v904 = vpop.f32.mrb[0].mxu0
    %905 = vmatprep.mubr.bf16.mxu0 0
    %906 = vmatmul.mubr.bf16.gmra.mrb[0].mxu0 %v847
    %v907 = vpop.f32.mrb[0].mxu0
    %v908 = vadd.f32 %v823, %v907
    %v909 = vpop.f32.mrb[0].mxu0
    %v910 = vpop.f32.mrb[0].mxu0
    %v911 = vadd.f32 %v823, %v910
    %v912 = vpop.f32.mrb[0].mxu0
    %913 = vdwg.mxu0
    %914 = vst [vmem:[#allocation2] sm:$0xff] %v884
    %915 = vst [vmem:[#allocation2 + $0x8] sm:$0xff] %v887
    %916 = vst [vmem:[#allocation2 + $0x10] sm:$0xff] %v892
    %917 = vst [vmem:[#allocation2 + $0x18] sm:$0xff] %v895
    %918 = vst [vmem:[#allocation2 + $0x20] sm:$0xff] %v900
    %919 = vst [vmem:[#allocation2 + $0x28] sm:$0xff] %v903
    %920 = vst [vmem:[#allocation2 + $0x30] sm:$0xff] %v908
    %921 = vst [vmem:[#allocation2 + $0x38] sm:$0xff] %v911
    %v922 = vld [vmem:[#allocation2] sm:$0xff]
    %v927 = vunpack.c.l.b16 %v810
    %v928 = vunpack.c.l.b16 %v811
    %v929 = vunpack.c.l.b16 %v812
    %v930 = vunpack.c.l.b16 %v813
    %v931 = vpack.c.b16 %v928, %v927
    %v932 = vpack.c.b16 %v930, %v929
    %935 = vmatprep.subr.bf16.mxu0 0
    %936 = vmatpush1.bf16.msra.mxu0 %v931
    %937 = vmatprep.subr.bf16.mxu0 0
    %938 = vmatpush1.bf16.msra.mxu0 %v932
    %939 = vmatprep.subr.bf16.mxu0 0
    %940 = vmatpush1.bf16.msra.mxu0 0
    %941 = vmatprep.subr.bf16.mxu0 0
    %942 = vmatpush1.bf16.msra.mxu0 0
    %943 = vmatprep.subr.bf16.mxu0 0
    %944 = vmatpush1.bf16.msra.mxu0 0
    %945 = vmatprep.subr.bf16.mxu0 0
    %946 = vmatpush1.bf16.msra.mxu0 0
    %947 = vmatprep.subr.bf16.mxu0 0
    %948 = vmatpush1.bf16.msra.mxu0 0
    %949 = vmatprep.subr.bf16.mxu0 0
    %950 = vmatpush1.bf16.msra.mxu0 0
    %951 = vmatprep.subr.bf16.mxu0 0
    %952 = vmatpush1.bf16.msra.mxu0 0
    %953 = vmatprep.subr.bf16.mxu0 0
    %954 = vmatpush1.bf16.msra.mxu0 0
    %955 = vmatprep.subr.bf16.mxu0 0
    %956 = vmatpush1.bf16.msra.mxu0 0
    %957 = vmatprep.subr.bf16.mxu0 0
    %958 = vmatpush1.bf16.msra.mxu0 0
    %959 = vmatprep.subr.bf16.mxu0 0
    %960 = vmatpush1.bf16.msra.mxu0 0
    %961 = vmatprep.subr.bf16.mxu0 0
    %962 = vmatpush1.bf16.msra.mxu0 0
    %963 = vmatprep.subr.bf16.mxu0 0
    %964 = vmatpush1.bf16.msra.mxu0 0
    %965 = vmatprep.subr.bf16.mxu0 0
    %966 = vmatpush1.bf16.msra.mxu0 0
    %967 = vmatprep.mubr.bf16.mxu0 0
    %968 = vmatmul.mubr.bf16.gmra.mrb[0].mxu0 %v196
    %v969 = vpop.f32.mrb[0].mxu0
    %v970 = vadd.f32 0.0, %v969
    %v971 = vpop.f32.mrb[0].mxu0
    %v972 = vpop.f32.mrb[0].mxu0
    %v973 = vpop.f32.mrb[0].mxu0
    %974 = vdwg.mxu0
    %v975 = vadd.f32 %v922, %v970
    %v976 = vxor.u32 %v975, 2147483648
    %v977 = vmul.f32 %v976, 1.442695
    %v978 = vpow.pop %v977
    %v979 = vadd.f32 %v978, 1.0
    %v980 = vrcp.pop %v979
    %v981 = vmul.f32 1.0, %v980
    %v982 = vtanh.pop %v975
    %v983 = vmul.f32 %v981, 0.0
    %985 = vrot.lane.b32.xlu0 %v982, 64
    %v986 = vpop.permute.xlu0 %985
    %v988 = vmul.f32 %v981, %v986
    %990 = vrot.lane.b32.xlu0 %v988, 32
    %v991 = vpop.permute.xlu0 %990
    %v993 = vadd.f32 %v983, %v991
    %v994 = vtanh.pop %v993
    %996 = vrot.lane.b32.xlu0 %v994, 64
    %v997 = vpop.permute.xlu0 %996
    %v999 = vmul.f32 %v981, %v997
    %v1000 = vld [vmem:[#allocation2 + $0x8] sm:$0xff]
    %v1001 = vpack.c.bf16 %v999, %v999
    %1003 = vrot.lane.b32.xlu0 %v1001, 32
    %v1004 = vpop.permute.xlu0 %1003
    %v1006 = vsel %vm194, %v1004, 0
    %1008 = vmatprep.subr.bf16.mxu0 0
    %1009 = vmatpush1.bf16.msra.mxu0 %v931
    %1010 = vmatprep.subr.bf16.mxu0 0
    %1011 = vmatpush1.bf16.msra.mxu0 %v932
    %1012 = vmatprep.subr.bf16.mxu0 0
    %1013 = vmatpush1.bf16.msra.mxu0 0
    %1014 = vmatprep.subr.bf16.mxu0 0
    %1015 = vmatpush1.bf16.msra.mxu0 0
    %1016 = vmatprep.subr.bf16.mxu0 0
    %1017 = vmatpush1.bf16.msra.mxu0 0
    %1018 = vmatprep.subr.bf16.mxu0 0
    %1019 = vmatpush1.bf16.msra.mxu0 0
    %1020 = vmatprep.subr.bf16.mxu0 0
    %1021 = vmatpush1.bf16.msra.mxu0 0
    %1022 = vmatprep.subr.bf16.mxu0 0
    %1023 = vmatpush1.bf16.msra.mxu0 0
    %1024 = vmatprep.subr.bf16.mxu0 0
    %1025 = vmatpush1.bf16.msra.mxu0 0
    %1026 = vmatprep.subr.bf16.mxu0 0
    %1027 = vmatpush1.bf16.msra.mxu0 0
    %1028 = vmatprep.subr.bf16.mxu0 0
    %1029 = vmatpush1.bf16.msra.mxu0 0
    %1030 = vmatprep.subr.bf16.mxu0 0
    %1031 = vmatpush1.bf16.msra.mxu0 0
    %1032 = vmatprep.subr.bf16.mxu0 0
    %1033 = vmatpush1.bf16.msra.mxu0 0
    %1034 = vmatprep.subr.bf16.mxu0 0
    %1035 = vmatpush1.bf16.msra.mxu0 0
    %1036 = vmatprep.subr.bf16.mxu0 0
    %1037 = vmatpush1.bf16.msra.mxu0 0
    %1038 = vmatprep.subr.bf16.mxu0 0
    %1039 = vmatpush1.bf16.msra.mxu0 0
    %1040 = vmatprep.mubr.bf16.mxu0 0
    %1041 = vmatmul.mubr.bf16.gmra.mrb[0].mxu0 %v1006
    %v1042 = vpop.f32.mrb[0].mxu0
    %v1043 = vadd.f32 0.0, %v1042
    %v1044 = vpop.f32.mrb[0].mxu0
    %v1045 = vpop.f32.mrb[0].mxu0
    %v1046 = vpop.f32.mrb[0].mxu0
    %1047 = vdwg.mxu0
    %v1048 = vadd.f32 %v1000, %v1043
    %v1049 = vxor.u32 %v1048, 2147483648
    %v1050 = vmul.f32 %v1049, 1.442695
    %v1051 = vpow.pop %v1050
    %v1052 = vadd.f32 %v1051, 1.0
    %v1053 = vrcp.pop %v1052
    %v1054 = vmul.f32 1.0, %v1053
    %v1055 = vtanh.pop %v1048
    %v1056 = vmul.f32 %v1054, %v993
    %1058 = vrot.lane.b32.xlu0 %v1055, 64
    %v1059 = vpop.permute.xlu0 %1058
    %v1061 = vmul.f32 %v1054, %v1059
    %1063 = vrot.lane.b32.xlu0 %v1061, 32
    %v1064 = vpop.permute.xlu0 %1063
    %v1066 = vadd.f32 %v1056, %v1064
    %v1067 = vtanh.pop %v1066
    %1069 = vrot.lane.b32.xlu0 %v1067, 64
    %v1070 = vpop.permute.xlu0 %1069
    %v1072 = vmul.f32 %v1054, %v1070
    %v1073 = vld [vmem:[#allocation2 + $0x10] sm:$0xff]
    %v1074 = vpack.c.bf16 %v1072, %v1072
    %1076 = vrot.lane.b32.xlu0 %v1074, 32
    %v1077 = vpop.permute.xlu0 %1076
    %v1079 = vsel %vm194, %v1077, 0
    %1081 = vmatprep.subr.bf16.mxu0 0
    %1082 = vmatpush1.bf16.msra.mxu0 %v931
    %1083 = vmatprep.subr.bf16.mxu0 0
    %1084 = vmatpush1.bf16.msra.mxu0 %v932
    %1085 = vmatprep.subr.bf16.mxu0 0
    %1086 = vmatpush1.bf16.msra.mxu0 0
    %1087 = vmatprep.subr.bf16.mxu0 0
    %1088 = vmatpush1.bf16.msra.mxu0 0
    %1089 = vmatprep.subr.bf16.mxu0 0
    %1090 = vmatpush1.bf16.msra.mxu0 0
    %1091 = vmatprep.subr.bf16.mxu0 0
    %1092 = vmatpush1.bf16.msra.mxu0 0
    %1093 = vmatprep.subr.bf16.mxu0 0
    %1094 = vmatpush1.bf16.msra.mxu0 0
    %1095 = vmatprep.subr.bf16.mxu0 0
    %1096 = vmatpush1.bf16.msra.mxu0 0
    %1097 = vmatprep.subr.bf16.mxu0 0
    %1098 = vmatpush1.bf16.msra.mxu0 0
    %1099 = vmatprep.subr.bf16.mxu0 0
    %1100 = vmatpush1.bf16.msra.mxu0 0
    %1101 = vmatprep.subr.bf16.mxu0 0
    %1102 = vmatpush1.bf16.msra.mxu0 0
    %1103 = vmatprep.subr.bf16.mxu0 0
    %1104 = vmatpush1.bf16.msra.mxu0 0
    %1105 = vmatprep.subr.bf16.mxu0 0
    %1106 = vmatpush1.bf16.msra.mxu0 0
    %1107 = vmatprep.subr.bf16.mxu0 0
    %1108 = vmatpush1.bf16.msra.mxu0 0
    %1109 = vmatprep.subr.bf16.mxu0 0
    %1110 = vmatpush1.bf16.msra.mxu0 0
    %1111 = vmatprep.subr.bf16.mxu0 0
    %1112 = vmatpush1.bf16.msra.mxu0 0
    %1113 = vmatprep.mubr.bf16.mxu0 0
    %1114 = vmatmul.mubr.bf16.gmra.mrb[0].mxu0 %v1079
    %v1115 = vpop.f32.mrb[0].mxu0
    %v1116 = vadd.f32 0.0, %v1115
    %v1117 = vpop.f32.mrb[0].mxu0
    %v1118 = vpop.f32.mrb[0].mxu0
    %v1119 = vpop.f32.mrb[0].mxu0
    %1120 = vdwg.mxu0
    %v1121 = vadd.f32 %v1073, %v1116
    %v1122 = vxor.u32 %v1121, 2147483648
    %v1123 = vmul.f32 %v1122, 1.442695
    %v1124 = vpow.pop %v1123
    %v1125 = vadd.f32 %v1124, 1.0
    %v1126 = vrcp.pop %v1125
    %v1127 = vmul.f32 1.0, %v1126
    %v1128 = vtanh.pop %v1121
    %v1129 = vmul.f32 %v1127, %v1066
    %1131 = vrot.lane.b32.xlu0 %v1128, 64
    %v1132 = vpop.permute.xlu0 %1131
    %v1134 = vmul.f32 %v1127, %v1132
    %1136 = vrot.lane.b32.xlu0 %v1134, 32
    %v1137 = vpop.permute.xlu0 %1136
    %v1139 = vadd.f32 %v1129, %v1137
    %v1140 = vtanh.pop %v1139
    %1142 = vrot.lane.b32.xlu0 %v1140, 64
    %v1143 = vpop.permute.xlu0 %1142
    %v1145 = vmul.f32 %v1127, %v1143
    %v1146 = vld [vmem:[#allocation2 + $0x18] sm:$0xff]
    %v1147 = vpack.c.bf16 %v1145, %v1145
    %1149 = vrot.lane.b32.xlu0 %v1147, 32
    %v1150 = vpop.permute.xlu0 %1149
    %v1152 = vsel %vm194, %v1150, 0
    %1154 = vmatprep.subr.bf16.mxu0 0
    %1155 = vmatpush1.bf16.msra.mxu0 %v931
    %1156 = vmatprep.subr.bf16.mxu0 0
    %1157 = vmatpush1.bf16.msra.mxu0 %v932
    %1158 = vmatprep.subr.bf16.mxu0 0
    %1159 = vmatpush1.bf16.msra.mxu0 0
    %1160 = vmatprep.subr.bf16.mxu0 0
    %1161 = vmatpush1.bf16.msra.mxu0 0
    %1162 = vmatprep.subr.bf16.mxu0 0
    %1163 = vmatpush1.bf16.msra.mxu0 0
    %1164 = vmatprep.subr.bf16.mxu0 0
    %1165 = vmatpush1.bf16.msra.mxu0 0
    %1166 = vmatprep.subr.bf16.mxu0 0
    %1167 = vmatpush1.bf16.msra.mxu0 0
    %1168 = vmatprep.subr.bf16.mxu0 0
    %1169 = vmatpush1.bf16.msra.mxu0 0
    %1170 = vmatprep.subr.bf16.mxu0 0
    %1171 = vmatpush1.bf16.msra.mxu0 0
    %1172 = vmatprep.subr.bf16.mxu0 0
    %1173 = vmatpush1.bf16.msra.mxu0 0
    %1174 = vmatprep.subr.bf16.mxu0 0
    %1175 = vmatpush1.bf16.msra.mxu0 0
    %1176 = vmatprep.subr.bf16.mxu0 0
    %1177 = vmatpush1.bf16.msra.mxu0 0
    %1178 = vmatprep.subr.bf16.mxu0 0
    %1179 = vmatpush1.bf16.msra.mxu0 0
    %1180 = vmatprep.subr.bf16.mxu0 0
    %1181 = vmatpush1.bf16.msra.mxu0 0
    %1182 = vmatprep.subr.bf16.mxu0 0
    %1183 = vmatpush1.bf16.msra.mxu0 0
    %1184 = vmatprep.subr.bf16.mxu0 0
    %1185 = vmatpush1.bf16.msra.mxu0 0
    %1186 = vmatprep.mubr.bf16.mxu0 0
    %1187 = vmatmul.mubr.bf16.gmra.mrb[0].mxu0 %v1152
    %v1188 = vpop.f32.mrb[0].mxu0
    %v1189 = vadd.f32 0.0, %v1188
    %v1190 = vpop.f32.mrb[0].mxu0
    %v1191 = vpop.f32.mrb[0].mxu0
    %v1192 = vpop.f32.mrb[0].mxu0
    %1193 = vdwg.mxu0
    %v1194 = vadd.f32 %v1146, %v1189
    %v1195 = vxor.u32 %v1194, 2147483648
    %v1196 = vmul.f32 %v1195, 1.442695
    %v1197 = vpow.pop %v1196
    %v1198 = vadd.f32 %v1197, 1.0
    %v1199 = vrcp.pop %v1198
    %v1200 = vmul.f32 1.0, %v1199
    %v1201 = vtanh.pop %v1194
    %v1202 = vmul.f32 %v1200, %v1139
    %1204 = vrot.lane.b32.xlu0 %v1201, 64
    %v1205 = vpop.permute.xlu0 %1204
    %v1207 = vmul.f32 %v1200, %v1205
    %1209 = vrot.lane.b32.xlu0 %v1207, 32
    %v1210 = vpop.permute.xlu0 %1209
    %v1212 = vadd.f32 %v1202, %v1210
    %v1213 = vtanh.pop %v1212
    %1215 = vrot.lane.b32.xlu0 %v1213, 64
    %v1216 = vpop.permute.xlu0 %1215
    %v1218 = vmul.f32 %v1200, %v1216
    %v1219 = vld [vmem:[#allocation2 + $0x20] sm:$0xff]
    %v1220 = vpack.c.bf16 %v1218, %v1218
    %1222 = vrot.lane.b32.xlu0 %v1220, 32
    %v1223 = vpop.permute.xlu0 %1222
    %v1225 = vsel %vm194, %v1223, 0
    %1227 = vmatprep.subr.bf16.mxu0 0
    %1228 = vmatpush1.bf16.msra.mxu0 %v931
    %1229 = vmatprep.subr.bf16.mxu0 0
    %1230 = vmatpush1.bf16.msra.mxu0 %v932
    %1231 = vmatprep.subr.bf16.mxu0 0
    %1232 = vmatpush1.bf16.msra.mxu0 0
    %1233 = vmatprep.subr.bf16.mxu0 0
    %1234 = vmatpush1.bf16.msra.mxu0 0
    %1235 = vmatprep.subr.bf16.mxu0 0
    %1236 = vmatpush1.bf16.msra.mxu0 0
    %1237 = vmatprep.subr.bf16.mxu0 0
    %1238 = vmatpush1.bf16.msra.mxu0 0
    %1239 = vmatprep.subr.bf16.mxu0 0
    %1240 = vmatpush1.bf16.msra.mxu0 0
    %1241 = vmatprep.subr.bf16.mxu0 0
    %1242 = vmatpush1.bf16.msra.mxu0 0
    %1243 = vmatprep.subr.bf16.mxu0 0
    %1244 = vmatpush1.bf16.msra.mxu0 0
    %1245 = vmatprep.subr.bf16.mxu0 0
    %1246 = vmatpush1.bf16.msra.mxu0 0
    %1247 = vmatprep.subr.bf16.mxu0 0
    %1248 = vmatpush1.bf16.msra.mxu0 0
    %1249 = vmatprep.subr.bf16.mxu0 0
    %1250 = vmatpush1.bf16.msra.mxu0 0
    %1251 = vmatprep.subr.bf16.mxu0 0
    %1252 = vmatpush1.bf16.msra.mxu0 0
    %1253 = vmatprep.subr.bf16.mxu0 0
    %1254 = vmatpush1.bf16.msra.mxu0 0
    %1255 = vmatprep.subr.bf16.mxu0 0
    %1256 = vmatpush1.bf16.msra.mxu0 0
    %1257 = vmatprep.subr.bf16.mxu0 0
    %1258 = vmatpush1.bf16.msra.mxu0 0
    %1259 = vmatprep.mubr.bf16.mxu0 0
    %1260 = vmatmul.mubr.bf16.gmra.mrb[0].mxu0 %v1225
    %v1261 = vpop.f32.mrb[0].mxu0
    %v1262 = vadd.f32 0.0, %v1261
    %v1263 = vpop.f32.mrb[0].mxu0
    %v1264 = vpop.f32.mrb[0].mxu0
    %v1265 = vpop.f32.mrb[0].mxu0
    %1266 = vdwg.mxu0
    %v1267 = vadd.f32 %v1219, %v1262
    %v1268 = vxor.u32 %v1267, 2147483648
    %v1269 = vmul.f32 %v1268, 1.442695
    %v1270 = vpow.pop %v1269
    %v1271 = vadd.f32 %v1270, 1.0
    %v1272 = vrcp.pop %v1271
    %v1273 = vmul.f32 1.0, %v1272
    %v1274 = vtanh.pop %v1267
    %v1275 = vmul.f32 %v1273, %v1212
    %1277 = vrot.lane.b32.xlu0 %v1274, 64
    %v1278 = vpop.permute.xlu0 %1277
    %v1280 = vmul.f32 %v1273, %v1278
    %1282 = vrot.lane.b32.xlu0 %v1280, 32
    %v1283 = vpop.permute.xlu0 %1282
    %v1285 = vadd.f32 %v1275, %v1283
    %v1286 = vtanh.pop %v1285
    %1288 = vrot.lane.b32.xlu0 %v1286, 64
    %v1289 = vpop.permute.xlu0 %1288
    %v1291 = vmul.f32 %v1273, %v1289
    %v1292 = vld [vmem:[#allocation2 + $0x28] sm:$0xff]
    %v1293 = vpack.c.bf16 %v1291, %v1291
    %1295 = vrot.lane.b32.xlu0 %v1293, 32
    %v1296 = vpop.permute.xlu0 %1295
    %v1298 = vsel %vm194, %v1296, 0
    %1300 = vmatprep.subr.bf16.mxu0 0
    %1301 = vmatpush1.bf16.msra.mxu0 %v931
    %1302 = vmatprep.subr.bf16.mxu0 0
    %1303 = vmatpush1.bf16.msra.mxu0 %v932
    %1304 = vmatprep.subr.bf16.mxu0 0
    %1305 = vmatpush1.bf16.msra.mxu0 0
    %1306 = vmatprep.subr.bf16.mxu0 0
    %1307 = vmatpush1.bf16.msra.mxu0 0
    %1308 = vmatprep.subr.bf16.mxu0 0
    %1309 = vmatpush1.bf16.msra.mxu0 0
    %1310 = vmatprep.subr.bf16.mxu0 0
    %1311 = vmatpush1.bf16.msra.mxu0 0
    %1312 = vmatprep.subr.bf16.mxu0 0
    %1313 = vmatpush1.bf16.msra.mxu0 0
    %1314 = vmatprep.subr.bf16.mxu0 0
    %1315 = vmatpush1.bf16.msra.mxu0 0
    %1316 = vmatprep.subr.bf16.mxu0 0
    %1317 = vmatpush1.bf16.msra.mxu0 0
    %1318 = vmatprep.subr.bf16.mxu0 0
    %1319 = vmatpush1.bf16.msra.mxu0 0
    %1320 = vmatprep.subr.bf16.mxu0 0
    %1321 = vmatpush1.bf16.msra.mxu0 0
    %1322 = vmatprep.subr.bf16.mxu0 0
    %1323 = vmatpush1.bf16.msra.mxu0 0
    %1324 = vmatprep.subr.bf16.mxu0 0
    %1325 = vmatpush1.bf16.msra.mxu0 0
    %1326 = vmatprep.subr.bf16.mxu0 0
    %1327 = vmatpush1.bf16.msra.mxu0 0
    %1328 = vmatprep.subr.bf16.mxu0 0
    %1329 = vmatpush1.bf16.msra.mxu0 0
    %1330 = vmatprep.subr.bf16.mxu0 0
    %1331 = vmatpush1.bf16.msra.mxu0 0
    %1332 = vmatprep.mubr.bf16.mxu0 0
    %1333 = vmatmul.mubr.bf16.gmra.mrb[0].mxu0 %v1298
    %v1334 = vpop.f32.mrb[0].mxu0
    %v1335 = vadd.f32 0.0, %v1334
    %v1336 = vpop.f32.mrb[0].mxu0
    %v1337 = vpop.f32.mrb[0].mxu0
    %v1338 = vpop.f32.mrb[0].mxu0
    %1339 = vdwg.mxu0
    %v1340 = vadd.f32 %v1292, %v1335
    %v1341 = vxor.u32 %v1340, 2147483648
    %v1342 = vmul.f32 %v1341, 1.442695
    %v1343 = vpow.pop %v1342
    %v1344 = vadd.f32 %v1343, 1.0
    %v1345 = vrcp.pop %v1344
    %v1346 = vmul.f32 1.0, %v1345
    %v1347 = vtanh.pop %v1340
    %v1348 = vmul.f32 %v1346, %v1285
    %1350 = vrot.lane.b32.xlu0 %v1347, 64
    %v1351 = vpop.permute.xlu0 %1350
    %v1353 = vmul.f32 %v1346, %v1351
    %1355 = vrot.lane.b32.xlu0 %v1353, 32
    %v1356 = vpop.permute.xlu0 %1355
    %v1358 = vadd.f32 %v1348, %v1356
    %v1359 = vtanh.pop %v1358
    %1361 = vrot.lane.b32.xlu0 %v1359, 64
    %v1362 = vpop.permute.xlu0 %1361
    %v1364 = vmul.f32 %v1346, %v1362
    %v1365 = vld [vmem:[#allocation2 + $0x30] sm:$0xff]
    %v1366 = vpack.c.bf16 %v1364, %v1364
    %1368 = vrot.lane.b32.xlu0 %v1366, 32
    %v1369 = vpop.permute.xlu0 %1368
    %v1371 = vsel %vm194, %v1369, 0
    %1373 = vmatprep.subr.bf16.mxu0 0
    %1374 = vmatpush1.bf16.msra.mxu0 %v931
    %1375 = vmatprep.subr.bf16.mxu0 0
    %1376 = vmatpush1.bf16.msra.mxu0 %v932
    %1377 = vmatprep.subr.bf16.mxu0 0
    %1378 = vmatpush1.bf16.msra.mxu0 0
    %1379 = vmatprep.subr.bf16.mxu0 0
    %1380 = vmatpush1.bf16.msra.mxu0 0
    %1381 = vmatprep.subr.bf16.mxu0 0
    %1382 = vmatpush1.bf16.msra.mxu0 0
    %1383 = vmatprep.subr.bf16.mxu0 0
    %1384 = vmatpush1.bf16.msra.mxu0 0
    %1385 = vmatprep.subr.bf16.mxu0 0
    %1386 = vmatpush1.bf16.msra.mxu0 0
    %1387 = vmatprep.subr.bf16.mxu0 0
    %1388 = vmatpush1.bf16.msra.mxu0 0
    %1389 = vmatprep.subr.bf16.mxu0 0
    %1390 = vmatpush1.bf16.msra.mxu0 0
    %1391 = vmatprep.subr.bf16.mxu0 0
    %1392 = vmatpush1.bf16.msra.mxu0 0
    %1393 = vmatprep.subr.bf16.mxu0 0
    %1394 = vmatpush1.bf16.msra.mxu0 0
    %1395 = vmatprep.subr.bf16.mxu0 0
    %1396 = vmatpush1.bf16.msra.mxu0 0
    %1397 = vmatprep.subr.bf16.mxu0 0
    %1398 = vmatpush1.bf16.msra.mxu0 0
    %1399 = vmatprep.subr.bf16.mxu0 0
    %1400 = vmatpush1.bf16.msra.mxu0 0
    %1401 = vmatprep.subr.bf16.mxu0 0
    %1402 = vmatpush1.bf16.msra.mxu0 0
    %1403 = vmatprep.subr.bf16.mxu0 0
    %1404 = vmatpush1.bf16.msra.mxu0 0
    %1405 = vmatprep.mubr.bf16.mxu0 0
    %1406 = vmatmul.mubr.bf16.gmra.mrb[0].mxu0 %v1371
    %v1407 = vpop.f32.mrb[0].mxu0
    %v1408 = vadd.f32 0.0, %v1407
    %v1409 = vpop.f32.mrb[0].mxu0
    %v1410 = vpop.f32.mrb[0].mxu0
    %v1411 = vpop.f32.mrb[0].mxu0
    %1412 = vdwg.mxu0
    %v1413 = vadd.f32 %v1365, %v1408
    %v1414 = vxor.u32 %v1413, 2147483648
    %v1415 = vmul.f32 %v1414, 1.442695
    %v1416 = vpow.pop %v1415
    %v1417 = vadd.f32 %v1416, 1.0
    %v1418 = vrcp.pop %v1417
    %v1419 = vmul.f32 1.0, %v1418
    %v1420 = vtanh.pop %v1413
    %v1421 = vmul.f32 %v1419, %v1358
    %1423 = vrot.lane.b32.xlu0 %v1420, 64
    %v1424 = vpop.permute.xlu0 %1423
    %v1426 = vmul.f32 %v1419, %v1424
    %1428 = vrot.lane.b32.xlu0 %v1426, 32
    %v1429 = vpop.permute.xlu0 %1428
    %v1431 = vadd.f32 %v1421, %v1429
    %v1432 = vtanh.pop %v1431
    %1434 = vrot.lane.b32.xlu0 %v1432, 64
    %v1435 = vpop.permute.xlu0 %1434
    %v1437 = vmul.f32 %v1419, %v1435
    %v1438 = vld [vmem:[#allocation2 + $0x38] sm:$0xff]
    %v1439 = vpack.c.bf16 %v1437, %v1437
    %1441 = vrot.lane.b32.xlu0 %v1439, 32
    %v1442 = vpop.permute.xlu0 %1441
    %v1444 = vsel %vm194, %v1442, 0
    %1446 = vmatprep.subr.bf16.mxu0 0
    %1447 = vmatpush1.bf16.msra.mxu0 %v931
    %1448 = vmatprep.subr.bf16.mxu0 0
    %1449 = vmatpush1.bf16.msra.mxu0 %v932
    %1450 = vmatprep.subr.bf16.mxu0 0
    %1451 = vmatpush1.bf16.msra.mxu0 0
    %1452 = vmatprep.subr.bf16.mxu0 0
    %1453 = vmatpush1.bf16.msra.mxu0 0
    %1454 = vmatprep.subr.bf16.mxu0 0
    %1455 = vmatpush1.bf16.msra.mxu0 0
    %1456 = vmatprep.subr.bf16.mxu0 0
    %1457 = vmatpush1.bf16.msra.mxu0 0
    %1458 = vmatprep.subr.bf16.mxu0 0
    %1459 = vmatpush1.bf16.msra.mxu0 0
    %1460 = vmatprep.subr.bf16.mxu0 0
    %1461 = vmatpush1.bf16.msra.mxu0 0
    %1462 = vmatprep.subr.bf16.mxu0 0
    %1463 = vmatpush1.bf16.msra.mxu0 0
    %1464 = vmatprep.subr.bf16.mxu0 0
    %1465 = vmatpush1.bf16.msra.mxu0 0
    %1466 = vmatprep.subr.bf16.mxu0 0
    %1467 = vmatpush1.bf16.msra.mxu0 0
    %1468 = vmatprep.subr.bf16.mxu0 0
    %1469 = vmatpush1.bf16.msra.mxu0 0
    %1470 = vmatprep.subr.bf16.mxu0 0
    %1471 = vmatpush1.bf16.msra.mxu0 0
    %1472 = vmatprep.subr.bf16.mxu0 0
    %1473 = vmatpush1.bf16.msra.mxu0 0
    %1474 = vmatprep.subr.bf16.mxu0 0
    %1475 = vmatpush1.bf16.msra.mxu0 0
    %1476 = vmatprep.subr.bf16.mxu0 0
    %1477 = vmatpush1.bf16.msra.mxu0 0
    %1478 = vmatprep.mubr.bf16.mxu0 0
    %1479 = vmatmul.mubr.bf16.gmra.mrb[0].mxu0 %v1444
    %v1480 = vpop.f32.mrb[0].mxu0
    %v1481 = vadd.f32 0.0, %v1480
    %v1482 = vpop.f32.mrb[0].mxu0
    %v1483 = vpop.f32.mrb[0].mxu0
    %v1484 = vpop.f32.mrb[0].mxu0
    %1485 = vdwg.mxu0
    %v1486 = vadd.f32 %v1438, %v1481
    %v1487 = vxor.u32 %v1486, 2147483648
    %v1488 = vmul.f32 %v1487, 1.442695
    %v1489 = vpow.pop %v1488
    %v1490 = vadd.f32 %v1489, 1.0
    %v1491 = vrcp.pop %v1490
    %v1492 = vmul.f32 1.0, %v1491
    %v1493 = vtanh.pop %v1486
    %v1494 = vmul.f32 %v1492, %v1431
    %1496 = vrot.lane.b32.xlu0 %v1493, 64
    %v1497 = vpop.permute.xlu0 %1496
    %v1499 = vmul.f32 %v1492, %v1497
    %1501 = vrot.lane.b32.xlu0 %v1499, 32
    %v1502 = vpop.permute.xlu0 %1501
    %v1504 = vadd.f32 %v1494, %v1502
    %v1505 = vtanh.pop %v1504
    %1507 = vrot.lane.b32.xlu0 %v1505, 64
    %v1508 = vpop.permute.xlu0 %1507
    %v1510 = vmul.f32 %v1492, %v1508
    %v1511 = vpack.c.bf16 %v1510, %v1510
    %v1512 = vld [vmem:[%s7] sm:$0xf]
    %v1513 = vld [vmem:[%s7 + $0x4] sm:$0xf]
    %v1514 = vld [vmem:[%s7 + $0x8] sm:$0xf]
    %v1515 = vld [vmem:[%s7 + $0xc] sm:$0xf]
    %v1516 = vld [vmem:[%s8] sm:$0x1]
    %v1518 = vlaneseq
    %v1519 = vshrl.u32 %v1518, 7
    %v1520 = vsub.s32 0, %v1519
    %v1521 = vrot.slane %v1516, %v1520
    %1524 = vrot.lane.b32.xlu0 %v1511, 32
    %v1525 = vpop.permute.xlu0 %1524
    %v1530 = vunpack.c.l.b16 %v1512
    %v1531 = vunpack.c.l.b16 %v1513
    %v1532 = vunpack.c.l.b16 %v1514
    %v1533 = vunpack.c.l.b16 %v1515
    %v1534 = vpack.c.b16 %v1531, %v1530
    %v1535 = vpack.c.b16 %v1533, %v1532
    %v1539 = vsel %vm194, %v1525, 0
    %1541 = vmatprep.subr.bf16.mxu0 0
    %1542 = vmatpush1.bf16.msra.mxu0 %v1534
    %1543 = vmatprep.subr.bf16.mxu0 0
    %1544 = vmatpush1.bf16.msra.mxu0 %v1535
    %1545 = vmatprep.subr.bf16.mxu0 0
    %1546 = vmatpush1.bf16.msra.mxu0 0
    %1547 = vmatprep.subr.bf16.mxu0 0
    %1548 = vmatpush1.bf16.msra.mxu0 0
    %1549 = vmatprep.subr.bf16.mxu0 0
    %1550 = vmatpush1.bf16.msra.mxu0 0
    %1551 = vmatprep.subr.bf16.mxu0 0
    %1552 = vmatpush1.bf16.msra.mxu0 0
    %1553 = vmatprep.subr.bf16.mxu0 0
    %1554 = vmatpush1.bf16.msra.mxu0 0
    %1555 = vmatprep.subr.bf16.mxu0 0
    %1556 = vmatpush1.bf16.msra.mxu0 0
    %1557 = vmatprep.subr.bf16.mxu0 0
    %1558 = vmatpush1.bf16.msra.mxu0 0
    %1559 = vmatprep.subr.bf16.mxu0 0
    %1560 = vmatpush1.bf16.msra.mxu0 0
    %1561 = vmatprep.subr.bf16.mxu0 0
    %1562 = vmatpush1.bf16.msra.mxu0 0
    %1563 = vmatprep.subr.bf16.mxu0 0
    %1564 = vmatpush1.bf16.msra.mxu0 0
    %1565 = vmatprep.subr.bf16.mxu0 0
    %1566 = vmatpush1.bf16.msra.mxu0 0
    %1567 = vmatprep.subr.bf16.mxu0 0
    %1568 = vmatpush1.bf16.msra.mxu0 0
    %1569 = vmatprep.subr.bf16.mxu0 0
    %1570 = vmatpush1.bf16.msra.mxu0 0
    %1571 = vmatprep.subr.bf16.mxu0 0
    %1572 = vmatpush1.bf16.msra.mxu0 0
    %1573 = vmatprep.mubr.bf16.mxu0 0
    %1574 = vmatmul.mubr.bf16.gmra.mrb[0].mxu0 %v1539
    %v1575 = vpop.f32.mrb[0].mxu0
    %v1576 = vadd.f32 %v1521, %v1575
    %v1577 = vpop.f32.mrb[0].mxu0
    %v1578 = vpop.f32.mrb[0].mxu0
    %v1579 = vpop.f32.mrb[0].mxu0
    %1580 = vdwg.mxu0
    %1581 = vst [vmem:[#allocation7] sm:$0xff] %v1576
    // Predicated region
    $region42: #{tpu_custom_call.1} parent=1 // pred_check
      _
    $region43: #{tpu_custom_call.1} parent=1 // pred_check_branch
      %1583 = sbr.rel (0) target = $region45
    $region44: #{tpu_custom_call.1} parent=1 // pred_region
      %s1585 = ssub.s32 128, 128
      %1586 = vsyncadd [#allocation6], %s1585
      %s1588 = sshll.u32 [#allocation7], 4
      %s1589 = int_to_ptr.vmem [resolvable:$true] %s1588
      %1591 = dma.vmem_to_hbm [thread:$0]  %s1589, 128, %s9, [#allocation6]
    $region45: #{tpu_custom_call.1} parent=1 // pred_fallthru
      _
    // Predicated region
    $region46: #{tpu_custom_call.1} parent=1 // pred_check
      _
    $region47: #{tpu_custom_call.1} parent=1 // pred_check_branch
      %1593 = sbr.rel (0) target = $region49
    $region48: #{tpu_custom_call.1} parent=1 // pred_region
      %1594 = dma.done [#allocation6], 128
    $region49: #{tpu_custom_call.1} parent=1 // pred_fallthru
      _
    %1595 = vsyncpa [#allocation5], 1
    %1596 = vsyncpa [#allocation6], 1

</llo_original>
